<compile_context>
chip_gen: v5e
topology: v5e:2x2
jax: 0.10.0
libtpu: 0.0.40
codegen_flags: <defaults>
</compile_context>

<pallas_src>
import functools

import jax
import jax.numpy as jnp
from jax import lax
from jax.experimental import pallas as pl
from jax.experimental.pallas import tpu as pltpu

_LANES = 128


def _cmd_kernel(x1_ref, x2_ref, acc_ref, *, n_moments, n_rows, n_cols, tile_d,
                row_chunk, tiles_per_group):
    """One (group, feature-tile) grid step.

    Accumulates per-moment, per-column squared differences into the resident
    (n_moments, tile_d) output block (same block index for every `k`, so it is
    the accumulator over this group's feature-tile reduction axis).
    """
    k = pl.program_id(1)

    @pl.when(k == 0)
    def _():
        acc_ref[...] = jnp.zeros_like(acc_ref)

    # Column mask for the (possibly partial) last feature tile.  Statically
    # skipped when tile_d divides D, so the aligned common case pays nothing.
    if n_cols % tile_d != 0:
        jg = pl.program_id(0) * tiles_per_group + k          # global tile index
        col_ids = jg * tile_d + lax.broadcasted_iota(jnp.int32, (1, tile_d), 1)
        col_mask = col_ids < n_cols
    else:
        col_mask = None

    def load(ref, start, size):
        x = ref[pl.ds(start, size), :].astype(jnp.float32)
        if col_mask is not None:
            x = jnp.where(col_mask, x, 0.0)      # zero cols -> zero contribution
        return x

    inv_n = jnp.float32(1.0 / n_rows)
    num_full = n_rows // row_chunk
    rem = n_rows - num_full * row_chunk
    small = num_full <= 8                                     # unroll hint

    # Column (axis-0) reductions on the otherwise idle MXU.  HIGHEST keeps the
    # ones-weighted sums f32-exact (no bf16 truncation of the summed operand).
    if row_chunk % 8 == 0:
        ones8 = jnp.ones((8, row_chunk), jnp.float32)         # hoisted once

        def colsum(x):
            r = jnp.dot(ones8, x, preferred_element_type=jnp.float32,
                        precision=lax.Precision.HIGHEST)
            return r[0:1, :]
    else:
        def colsum(x):
            return jnp.sum(x, axis=0, keepdims=True)

    def tail_colsum(x):
        return jnp.sum(x, axis=0, keepdims=True)

    def chunk_start(c):
        s = c * row_chunk
        if row_chunk % 8 == 0:
            s = pl.multiple_of(s, 8)
        return s

    zero_row = jnp.zeros((1, tile_d), jnp.float32)

    # ---- pass 1: column sums over the batch axis -> per-column means. ----
    def mean_body(c, carry):
        s1, s2 = carry
        s = chunk_start(c)
        return (s1 + colsum(load(x1_ref, s, row_chunk)),
                s2 + colsum(load(x2_ref, s, row_chunk)))

    s1, s2 = lax.fori_loop(0, num_full, mean_body, (zero_row, zero_row),
                           unroll=small)
    if rem:
        x1r = load(x1_ref, num_full * row_chunk, rem)
        x2r = load(x2_ref, num_full * row_chunk, rem)
        s1 = s1 + tail_colsum(x1r)
        s2 = s2 + tail_colsum(x2r)
    mx1 = s1 * inv_n
    mx2 = s2 * inv_n

    # ---- pass 2: centered power sums, chunked over the batch axis so only
    #      (row_chunk, tile_d) temporaries are live (they stay in vregs). ----
    def chunk_moments(x1c, x2c, reduce_fn):
        sx1 = x1c - mx1
        sx2 = x2c - mx2
        p1, p2 = sx1, sx2
        outs = []
        for _ in range(n_moments - 1):                        # moments 2..n
            p1 = p1 * sx1
            p2 = p2 * sx2
            outs.append(reduce_fn(p1))
            outs.append(reduce_fn(p2))
        return outs

    sums = [zero_row] * (2 * (n_moments - 1))
    if n_moments > 1:
        def power_body(c, carry):
            s = chunk_start(c)
            outs = chunk_moments(load(x1_ref, s, row_chunk),
                                 load(x2_ref, s, row_chunk), colsum)
            return tuple(a + o for a, o in zip(carry, outs))

        sums = list(lax.fori_loop(0, num_full, power_body, tuple(sums),
                                  unroll=small))
        if rem:
            outs = chunk_moments(x1r, x2r, tail_colsum)
            sums = [a + o for a, o in zip(sums, outs)]

    # ---- accumulate per-moment, per-column squared differences (no concat;
    #      sqrt only in the wrapper epilogue after ALL tiles / groups). ----
    d0 = mx1 - mx2
    acc_ref[0:1, :] += d0 * d0
    for m in range(n_moments - 1):
        dk = (sums[2 * m] - sums[2 * m + 1]) * inv_n
        acc_ref[m + 1:m + 2, :] += dk * dk


def cmd(x1, x2, n_moments, *, max_tile_d=1024, max_row_chunk=256):
    """Pallas implementation of CMD.forward(x1, x2, n_moments)."""
    assert x1.shape == x2.shape and x1.ndim == 2
    n_moments = int(n_moments)
    assert n_moments >= 1
    N, D = (int(s) for s in x1.shape)
    itemsize = jnp.dtype(x1.dtype).itemsize

    # Generation-aware VMEM budget (v5e/v6e: 128 MiB, v7x: 64 MiB).
    try:
        vmem_cap = int(pltpu.get_tpu_info().vmem_capacity_bytes)
    except Exception:  # conservative fallback
        vmem_cap = 64 << 20
    budget = int(vmem_cap * 0.70)

    row_chunk = min(N, max_row_chunk)

    def vmem_est(td):
        blocks = 2 * 2 * N * td * itemsize           # x1, x2, double-buffered
        chunk_tmp = 8 * row_chunk * td * 4            # live per-chunk temporaries
        acc = 2 * max(n_moments, 8) * td * 4          # resident output block
        return blocks + chunk_tmp + acc + (2 << 20)

    if D < _LANES:
        tile_d = D                                    # full-dim block (allowed)
    else:
        # Lane-dense tiles, always <= D, shrunk until the working set fits.
        tile_d = min(D // _LANES, max(max_tile_d // _LANES, 1)) * _LANES
        while tile_d > _LANES and vmem_est(tile_d) > budget:
            tile_d = max(_LANES, (tile_d // 2) // _LANES * _LANES)
        # TODO(synk): if even tile_d=128 exceeds the budget (huge N), a second
        # kernel pass tiling the batch axis would be needed.

    num_tiles = pl.cdiv(D, tile_d)
    n_groups = 2 if (num_tiles >= 2 and num_tiles % 2 == 0) else 1
    tiles_per_group = num_tiles // n_groups

    vmem_limit = int(min(max(vmem_est(tile_d) + (8 << 20), 32 << 20),
                         vmem_cap - (2 << 20)))

    kernel = functools.partial(
        _cmd_kernel, n_moments=n_moments, n_rows=N, n_cols=D, tile_d=tile_d,
        row_chunk=row_chunk, tiles_per_group=tiles_per_group)

    acc = pl.pallas_call(
        kernel,
        out_shape=jax.ShapeDtypeStruct((n_groups, n_moments, tile_d),
                                       jnp.float32),
        grid=(n_groups, tiles_per_group),
        # TODO(synk): bump inputs to pipeline_mode=pl.Buffered(3) if profiles
        # show exposed input DMA on v5e after the VALU-work reduction.
        in_specs=[
            pl.BlockSpec((N, tile_d), lambda p, k: (0, p * tiles_per_group + k)),
            pl.BlockSpec((N, tile_d), lambda p, k: (0, p * tiles_per_group + k)),
        ],
        out_specs=pl.BlockSpec((None, n_moments, tile_d),
                               lambda p, k: (p, 0, 0)),
        compiler_params=pltpu.CompilerParams(
            dimension_semantics=("parallel", "arbitrary"),
            vmem_limit_bytes=vmem_limit,
        ),
    )(x1, x2)

    # sqrt only after the per-moment sum-of-squares is accumulated over ALL
    # feature tiles and both TensorCore groups.
    per_moment = jnp.sum(acc, axis=(0, 2))            # (n_moments,)
    return jnp.sum(jnp.sqrt(per_moment))


def _cmd_ref(x1, x2, n_moments):
    # Pure-JAX reference mirroring the PyTorch module, for correctness check.
    mx1 = jnp.mean(x1, 0)
    mx2 = jnp.mean(x2, 0)
    sx1 = x1 - mx1
    sx2 = x2 - mx2
    scms = jnp.sqrt(jnp.sum((mx1 - mx2) ** 2))
    for i in range(n_moments - 1):
        k = i + 2
        ss1 = jnp.mean(sx1 ** k, 0)
        ss2 = jnp.mean(sx2 ** k, 0)
        scms = scms + jnp.sqrt(jnp.sum((ss1 - ss2) ** 2))
    return scms


if __name__ == "__main__":
    key = jax.random.PRNGKey(0)
    k1, k2, k3, k4 = jax.random.split(key, 4)

    # Case A: small shape matching the module's typical use (single tile,
    # no masking, whole batch in one chunk).
    N, D, n_moments = 8, 32, 5
    x1 = jax.random.normal(k1, (N, D), dtype=jnp.float32)
    x2 = jax.random.normal(k2, (N, D), dtype=jnp.float32) * 0.9 + 0.1
    out = jax.block_until_ready(cmd(x1, x2, n_moments))
    ref = _cmd_ref(x1, x2, n_moments)
    assert jnp.allclose(out, ref, rtol=1e-4, atol=1e-4), (out, ref)

    # Case B: exercises the partial-tile column mask, the 2-group (megacore)
    # grid and the batch-chunk remainder path.
    N2, D2, n_moments2 = 20, 300, 3
    y1 = jax.random.normal(k3, (N2, D2), dtype=jnp.float32)
    y2 = jax.random.normal(k4, (N2, D2), dtype=jnp.float32) * 1.1 - 0.2
    out2 = jax.block_until_ready(cmd(y1, y2, n_moments2, max_row_chunk=8))
    ref2 = _cmd_ref(y1, y2, n_moments2)
    assert jnp.allclose(out2, ref2, rtol=1e-4, atol=1e-4), (out2, ref2)

    print("KERNEL_OK")
</pallas_src>

<mosaic_0001>
module attributes {stable_mosaic.version = 11 : i64} {
  func.func @_cmd_kernel(%arg0: i32, %arg1: i32, %arg2: memref<8x32xf32, #tpu.memory_space<vmem>>, %arg3: memref<8x32xf32, #tpu.memory_space<vmem>>, %arg4: memref<1x5x32xf32, #tpu.memory_space<vmem>>) attributes {dimension_semantics = [#tpu.dimension_semantics<parallel>, #tpu.dimension_semantics<arbitrary>], iteration_bounds = array<i64: 1, 1>, scalar_prefetch = 0 : i64, scratch_operands = 0 : i64, tpu.core_type = #tpu.core_type<tc>, window_params = [{transform_indices = @transform_0, window_bounds = array<i64: 8, 32>}, {transform_indices = @transform_1, window_bounds = array<i64: 8, 32>}, {transform_indices = @transform_2, window_bounds = array<i64: 1, 5, 32>}]} {
    %c0_i32 = arith.constant 0 : i32
    %0 = arith.cmpi eq, %arg1, %c0_i32 : i32
    %1 = arith.extui %0 : i1 to i32
    %c0_i32_0 = arith.constant 0 : i32
    %2 = arith.cmpi ne, %1, %c0_i32_0 : i32
    scf.if %2 {
      %cst_51 = arith.constant 0.000000e+00 : f32
      %111 = vector.broadcast %cst_51 : f32 to vector<5x32xf32>
      %c0_52 = arith.constant 0 : index
      %c0_53 = arith.constant 0 : index
      %c0_54 = arith.constant 0 : index
      %112 = vector.load %arg4[%c0_52, %c0_53, %c0_54] : memref<1x5x32xf32, #tpu.memory_space<vmem>>, vector<1x5x32xf32>
      %113 = vector.shape_cast %112 : vector<1x5x32xf32> to vector<5x32xf32>
      %114 = vector.shape_cast %111 : vector<5x32xf32> to vector<1x5x32xf32>
      tpu.vector_store %arg4[%c0_52, %c0_53, %c0_54], %114 {strides = array<i32>} : memref<1x5x32xf32, #tpu.memory_space<vmem>>, vector<1x5x32xf32>,
    } else {
    }
    %cst = arith.constant 1.000000e+00 : f32
    %3 = vector.broadcast %cst : f32 to vector<8x8xf32>
    %cst_1 = arith.constant 0.000000e+00 : f32
    %4 = vector.broadcast %cst_1 : f32 to vector<1x32xf32>
    %c0_i32_2 = arith.constant 0 : i32
    %c8_i32 = arith.constant 8 : i32
    %5 = arith.muli %c0_i32_2, %c8_i32 : i32
    %6 = tpu.assume_multiple %5, 8 : i32
    %7 = arith.index_cast %6 : i32 to index
    %c0 = arith.constant 0 : index
    %8 = vector.load %arg2[%7, %c0] : memref<8x32xf32, #tpu.memory_space<vmem>>, vector<8x32xf32>
    %cst_3 = arith.constant dense<0.000000e+00> : vector<8x32xf32>
    %9 = tpu.matmul %3, %8, %cst_3 {dimension_numbers = #tpu.dot_dimension_numbers<[1], [0], [0], [1], [0, 0, 1, 1], [], []>, precision = #tpu.contract_precision<fp32>} : vector<8x8xf32>, vector<8x32xf32>, vector<8x32xf32> -> vector<8x32xf32>
    %10 = vector.extract_strided_slice %9 {offsets = [0, 0], sizes = [1, 32], strides = [1, 1]} : vector<8x32xf32> to vector<1x32xf32>
    %11 = arith.addf %4, %10 : vector<1x32xf32>
    %12 = arith.index_cast %6 : i32 to index
    %c0_4 = arith.constant 0 : index
    %13 = vector.load %arg3[%12, %c0_4] : memref<8x32xf32, #tpu.memory_space<vmem>>, vector<8x32xf32>
    %cst_5 = arith.constant dense<0.000000e+00> : vector<8x32xf32>
    %14 = tpu.matmul %3, %13, %cst_5 {dimension_numbers = #tpu.dot_dimension_numbers<[1], [0], [0], [1], [0, 0, 1, 1], [], []>, precision = #tpu.contract_precision<fp32>} : vector<8x8xf32>, vector<8x32xf32>, vector<8x32xf32> -> vector<8x32xf32>
    %15 = vector.extract_strided_slice %14 {offsets = [0, 0], sizes = [1, 32], strides = [1, 1]} : vector<8x32xf32> to vector<1x32xf32>
    %16 = arith.addf %4, %15 : vector<1x32xf32>
    %c1_i32 = arith.constant 1 : i32
    %cst_6 = arith.constant 1.250000e-01 : f32
    %17 = vector.broadcast %cst_6 : f32 to vector<1x32xf32>
    %18 = arith.mulf %11, %17 : vector<1x32xf32>
    %cst_7 = arith.constant 1.250000e-01 : f32
    %19 = vector.broadcast %cst_7 : f32 to vector<1x32xf32>
    %20 = arith.mulf %16, %19 : vector<1x32xf32>
    %c0_i32_8 = arith.constant 0 : i32
    %c8_i32_9 = arith.constant 8 : i32
    %21 = arith.muli %c0_i32_8, %c8_i32_9 : i32
    %22 = tpu.assume_multiple %21, 8 : i32
    %23 = arith.index_cast %22 : i32 to index
    %c0_10 = arith.constant 0 : index
    %24 = vector.load %arg2[%23, %c0_10] : memref<8x32xf32, #tpu.memory_space<vmem>>, vector<8x32xf32>
    %25 = arith.index_cast %22 : i32 to index
    %c0_11 = arith.constant 0 : index
    %26 = vector.load %arg3[%25, %c0_11] : memref<8x32xf32, #tpu.memory_space<vmem>>, vector<8x32xf32>
    %27 = vector.broadcast %18 : vector<1x32xf32> to vector<8x32xf32>
    %28 = arith.subf %24, %27 : vector<8x32xf32>
    %29 = vector.broadcast %20 : vector<1x32xf32> to vector<8x32xf32>
    %30 = arith.subf %26, %29 : vector<8x32xf32>
    %31 = arith.mulf %28, %28 : vector<8x32xf32>
    %32 = arith.mulf %30, %30 : vector<8x32xf32>
    %cst_12 = arith.constant dense<0.000000e+00> : vector<8x32xf32>
    %33 = tpu.matmul %3, %31, %cst_12 {dimension_numbers = #tpu.dot_dimension_numbers<[1], [0], [0], [1], [0, 0, 1, 1], [], []>, precision = #tpu.contract_precision<fp32>} : vector<8x8xf32>, vector<8x32xf32>, vector<8x32xf32> -> vector<8x32xf32>
    %34 = vector.extract_strided_slice %33 {offsets = [0, 0], sizes = [1, 32], strides = [1, 1]} : vector<8x32xf32> to vector<1x32xf32>
    %cst_13 = arith.constant dense<0.000000e+00> : vector<8x32xf32>
    %35 = tpu.matmul %3, %32, %cst_13 {dimension_numbers = #tpu.dot_dimension_numbers<[1], [0], [0], [1], [0, 0, 1, 1], [], []>, precision = #tpu.contract_precision<fp32>} : vector<8x8xf32>, vector<8x32xf32>, vector<8x32xf32> -> vector<8x32xf32>
    %36 = vector.extract_strided_slice %35 {offsets = [0, 0], sizes = [1, 32], strides = [1, 1]} : vector<8x32xf32> to vector<1x32xf32>
    %37 = arith.mulf %31, %28 : vector<8x32xf32>
    %38 = arith.mulf %32, %30 : vector<8x32xf32>
    %cst_14 = arith.constant dense<0.000000e+00> : vector<8x32xf32>
    %39 = tpu.matmul %3, %37, %cst_14 {dimension_numbers = #tpu.dot_dimension_numbers<[1], [0], [0], [1], [0, 0, 1, 1], [], []>, precision = #tpu.contract_precision<fp32>} : vector<8x8xf32>, vector<8x32xf32>, vector<8x32xf32> -> vector<8x32xf32>
    %40 = vector.extract_strided_slice %39 {offsets = [0, 0], sizes = [1, 32], strides = [1, 1]} : vector<8x32xf32> to vector<1x32xf32>
    %cst_15 = arith.constant dense<0.000000e+00> : vector<8x32xf32>
    %41 = tpu.matmul %3, %38, %cst_15 {dimension_numbers = #tpu.dot_dimension_numbers<[1], [0], [0], [1], [0, 0, 1, 1], [], []>, precision = #tpu.contract_precision<fp32>} : vector<8x8xf32>, vector<8x32xf32>, vector<8x32xf32> -> vector<8x32xf32>
    %42 = vector.extract_strided_slice %41 {offsets = [0, 0], sizes = [1, 32], strides = [1, 1]} : vector<8x32xf32> to vector<1x32xf32>
    %43 = arith.mulf %37, %28 : vector<8x32xf32>
    %44 = arith.mulf %38, %30 : vector<8x32xf32>
    %cst_16 = arith.constant dense<0.000000e+00> : vector<8x32xf32>
    %45 = tpu.matmul %3, %43, %cst_16 {dimension_numbers = #tpu.dot_dimension_numbers<[1], [0], [0], [1], [0, 0, 1, 1], [], []>, precision = #tpu.contract_precision<fp32>} : vector<8x8xf32>, vector<8x32xf32>, vector<8x32xf32> -> vector<8x32xf32>
    %46 = vector.extract_strided_slice %45 {offsets = [0, 0], sizes = [1, 32], strides = [1, 1]} : vector<8x32xf32> to vector<1x32xf32>
    %cst_17 = arith.constant dense<0.000000e+00> : vector<8x32xf32>
    %47 = tpu.matmul %3, %44, %cst_17 {dimension_numbers = #tpu.dot_dimension_numbers<[1], [0], [0], [1], [0, 0, 1, 1], [], []>, precision = #tpu.contract_precision<fp32>} : vector<8x8xf32>, vector<8x32xf32>, vector<8x32xf32> -> vector<8x32xf32>
    %48 = vector.extract_strided_slice %47 {offsets = [0, 0], sizes = [1, 32], strides = [1, 1]} : vector<8x32xf32> to vector<1x32xf32>
    %49 = arith.mulf %43, %28 : vector<8x32xf32>
    %50 = arith.mulf %44, %30 : vector<8x32xf32>
    %cst_18 = arith.constant dense<0.000000e+00> : vector<8x32xf32>
    %51 = tpu.matmul %3, %49, %cst_18 {dimension_numbers = #tpu.dot_dimension_numbers<[1], [0], [0], [1], [0, 0, 1, 1], [], []>, precision = #tpu.contract_precision<fp32>} : vector<8x8xf32>, vector<8x32xf32>, vector<8x32xf32> -> vector<8x32xf32>
    %52 = vector.extract_strided_slice %51 {offsets = [0, 0], sizes = [1, 32], strides = [1, 1]} : vector<8x32xf32> to vector<1x32xf32>
    %cst_19 = arith.constant dense<0.000000e+00> : vector<8x32xf32>
    %53 = tpu.matmul %3, %50, %cst_19 {dimension_numbers = #tpu.dot_dimension_numbers<[1], [0], [0], [1], [0, 0, 1, 1], [], []>, precision = #tpu.contract_precision<fp32>} : vector<8x8xf32>, vector<8x32xf32>, vector<8x32xf32> -> vector<8x32xf32>
    %54 = vector.extract_strided_slice %53 {offsets = [0, 0], sizes = [1, 32], strides = [1, 1]} : vector<8x32xf32> to vector<1x32xf32>
    %55 = arith.addf %4, %34 : vector<1x32xf32>
    %56 = arith.addf %4, %36 : vector<1x32xf32>
    %57 = arith.addf %4, %40 : vector<1x32xf32>
    %58 = arith.addf %4, %42 : vector<1x32xf32>
    %59 = arith.addf %4, %46 : vector<1x32xf32>
    %60 = arith.addf %4, %48 : vector<1x32xf32>
    %61 = arith.addf %4, %52 : vector<1x32xf32>
    %62 = arith.addf %4, %54 : vector<1x32xf32>
    %c1_i32_20 = arith.constant 1 : i32
    %63 = arith.subf %18, %20 : vector<1x32xf32>
    %c0_21 = arith.constant 0 : index
    %c0_22 = arith.constant 0 : index
    %c0_23 = arith.constant 0 : index
    %64 = vector.load %arg4[%c0_21, %c0_22, %c0_23] : memref<1x5x32xf32, #tpu.memory_space<vmem>>, vector<1x1x32xf32>
    %65 = vector.shape_cast %64 : vector<1x1x32xf32> to vector<1x32xf32>
    %66 = arith.mulf %63, %63 : vector<1x32xf32>
    %67 = arith.addf %65, %66 : vector<1x32xf32>
    %c0_24 = arith.constant 0 : index
    %c0_25 = arith.constant 0 : index
    %c0_26 = arith.constant 0 : index
    %68 = vector.load %arg4[%c0_24, %c0_25, %c0_26] : memref<1x5x32xf32, #tpu.memory_space<vmem>>, vector<1x1x32xf32>
    %69 = vector.shape_cast %68 : vector<1x1x32xf32> to vector<1x32xf32>
    %70 = vector.shape_cast %67 : vector<1x32xf32> to vector<1x1x32xf32>
    tpu.vector_store %arg4[%c0_24, %c0_25, %c0_26], %70 {strides = array<i32>} : memref<1x5x32xf32, #tpu.memory_space<vmem>>, vector<1x1x32xf32>,
    %71 = arith.subf %55, %56 : vector<1x32xf32>
    %cst_27 = arith.constant 1.250000e-01 : f32
    %72 = vector.broadcast %cst_27 : f32 to vector<1x32xf32>
    %73 = arith.mulf %71, %72 : vector<1x32xf32>
    %c0_28 = arith.constant 0 : index
    %c1 = arith.constant 1 : index
    %c0_29 = arith.constant 0 : index
    %74 = vector.load %arg4[%c0_28, %c1, %c0_29] : memref<1x5x32xf32, #tpu.memory_space<vmem>>, vector<1x1x32xf32>
    %75 = vector.shape_cast %74 : vector<1x1x32xf32> to vector<1x32xf32>
    %76 = arith.mulf %73, %73 : vector<1x32xf32>
    %77 = arith.addf %75, %76 : vector<1x32xf32>
    %c0_30 = arith.constant 0 : index
    %c1_31 = arith.constant 1 : index
    %c0_32 = arith.constant 0 : index
    %78 = vector.load %arg4[%c0_30, %c1_31, %c0_32] : memref<1x5x32xf32, #tpu.memory_space<vmem>>, vector<1x1x32xf32>
    %79 = vector.shape_cast %78 : vector<1x1x32xf32> to vector<1x32xf32>
    %80 = vector.shape_cast %77 : vector<1x32xf32> to vector<1x1x32xf32>
    tpu.vector_store %arg4[%c0_30, %c1_31, %c0_32], %80 {strides = array<i32>} : memref<1x5x32xf32, #tpu.memory_space<vmem>>, vector<1x1x32xf32>,
    %81 = arith.subf %57, %58 : vector<1x32xf32>
    %cst_33 = arith.constant 1.250000e-01 : f32
    %82 = vector.broadcast %cst_33 : f32 to vector<1x32xf32>
    %83 = arith.mulf %81, %82 : vector<1x32xf32>
    %c0_34 = arith.constant 0 : index
    %c2 = arith.constant 2 : index
    %c0_35 = arith.constant 0 : index
    %84 = vector.load %arg4[%c0_34, %c2, %c0_35] : memref<1x5x32xf32, #tpu.memory_space<vmem>>, vector<1x1x32xf32>
    %85 = vector.shape_cast %84 : vector<1x1x32xf32> to vector<1x32xf32>
    %86 = arith.mulf %83, %83 : vector<1x32xf32>
    %87 = arith.addf %85, %86 : vector<1x32xf32>
    %c0_36 = arith.constant 0 : index
    %c2_37 = arith.constant 2 : index
    %c0_38 = arith.constant 0 : index
    %88 = vector.load %arg4[%c0_36, %c2_37, %c0_38] : memref<1x5x32xf32, #tpu.memory_space<vmem>>, vector<1x1x32xf32>
    %89 = vector.shape_cast %88 : vector<1x1x32xf32> to vector<1x32xf32>
    %90 = vector.shape_cast %87 : vector<1x32xf32> to vector<1x1x32xf32>
    tpu.vector_store %arg4[%c0_36, %c2_37, %c0_38], %90 {strides = array<i32>} : memref<1x5x32xf32, #tpu.memory_space<vmem>>, vector<1x1x32xf32>,
    %91 = arith.subf %59, %60 : vector<1x32xf32>
    %cst_39 = arith.constant 1.250000e-01 : f32
    %92 = vector.broadcast %cst_39 : f32 to vector<1x32xf32>
    %93 = arith.mulf %91, %92 : vector<1x32xf32>
    %c0_40 = arith.constant 0 : index
    %c3 = arith.constant 3 : index
    %c0_41 = arith.constant 0 : index
    %94 = vector.load %arg4[%c0_40, %c3, %c0_41] : memref<1x5x32xf32, #tpu.memory_space<vmem>>, vector<1x1x32xf32>
    %95 = vector.shape_cast %94 : vector<1x1x32xf32> to vector<1x32xf32>
    %96 = arith.mulf %93, %93 : vector<1x32xf32>
    %97 = arith.addf %95, %96 : vector<1x32xf32>
    %c0_42 = arith.constant 0 : index
    %c3_43 = arith.constant 3 : index
    %c0_44 = arith.constant 0 : index
    %98 = vector.load %arg4[%c0_42, %c3_43, %c0_44] : memref<1x5x32xf32, #tpu.memory_space<vmem>>, vector<1x1x32xf32>
    %99 = vector.shape_cast %98 : vector<1x1x32xf32> to vector<1x32xf32>
    %100 = vector.shape_cast %97 : vector<1x32xf32> to vector<1x1x32xf32>
    tpu.vector_store %arg4[%c0_42, %c3_43, %c0_44], %100 {strides = array<i32>} : memref<1x5x32xf32, #tpu.memory_space<vmem>>, vector<1x1x32xf32>,
    %101 = arith.subf %61, %62 : vector<1x32xf32>
    %cst_45 = arith.constant 1.250000e-01 : f32
    %102 = vector.broadcast %cst_45 : f32 to vector<1x32xf32>
    %103 = arith.mulf %101, %102 : vector<1x32xf32>
    %c0_46 = arith.constant 0 : index
    %c4 = arith.constant 4 : index
    %c0_47 = arith.constant 0 : index
    %104 = vector.load %arg4[%c0_46, %c4, %c0_47] : memref<1x5x32xf32, #tpu.memory_space<vmem>>, vector<1x1x32xf32>
    %105 = vector.shape_cast %104 : vector<1x1x32xf32> to vector<1x32xf32>
    %106 = arith.mulf %103, %103 : vector<1x32xf32>
    %107 = arith.addf %105, %106 : vector<1x32xf32>
    %c0_48 = arith.constant 0 : index
    %c4_49 = arith.constant 4 : index
    %c0_50 = arith.constant 0 : index
    %108 = vector.load %arg4[%c0_48, %c4_49, %c0_50] : memref<1x5x32xf32, #tpu.memory_space<vmem>>, vector<1x1x32xf32>
    %109 = vector.shape_cast %108 : vector<1x1x32xf32> to vector<1x32xf32>
    %110 = vector.shape_cast %107 : vector<1x32xf32> to vector<1x1x32xf32>
    tpu.vector_store %arg4[%c0_48, %c4_49, %c0_50], %110 {strides = array<i32>} : memref<1x5x32xf32, #tpu.memory_space<vmem>>, vector<1x1x32xf32>,
    return
  }
  func.func @transform_0(%arg0: i32, %arg1: i32) -> (i32, i32) {
    %c1_i32 = arith.constant 1 : i32
    %0 = arith.muli %arg0, %c1_i32 : i32
    %1 = arith.addi %0, %arg1 : i32
    %c0_i32 = arith.constant 0 : i32
    %c0_i32_0 = arith.constant 0 : i32
    return %c0_i32, %1 : i32, i32
  }
  func.func @transform_1(%arg0: i32, %arg1: i32) -> (i32, i32) {
    %c1_i32 = arith.constant 1 : i32
    %0 = arith.muli %arg0, %c1_i32 : i32
    %1 = arith.addi %0, %arg1 : i32
    %c0_i32 = arith.constant 0 : i32
    %c0_i32_0 = arith.constant 0 : i32
    return %c0_i32, %1 : i32, i32
  }
  func.func @transform_2(%arg0: i32, %arg1: i32) -> (i32, i32, i32) {
    %c0_i32 = arith.constant 0 : i32
    %c0_i32_0 = arith.constant 0 : i32
    %c0_i32_1 = arith.constant 0 : i32
    return %arg0, %c0_i32, %c0_i32_0 : i32, i32, i32
  }
}

</mosaic_0001>

<llo_original>
// kernel: tpu_custom_call.1
$region0: #{tpu_custom_call.1}
  #allocation0 [shape = 'u32[]', space=smem, size = 0x4, offset = 0x4, fixed_abs, tag = 'smem constant byte address 0x4 - core index']
  #allocation1 [shape = 'u32[72,128]{1,0:T(1,128)}', space=vmem, size = 0x9000, scoped, tag = 'internal scratch']
  %s0 = inlined_call_operand.hbm [shape: f32[8,32], index: 0, kind: input, shape index: {}]
  %s1 = inlined_call_operand.hbm [shape: f32[8,32], index: 1, kind: input, shape index: {}]
  %s2 = inlined_call_operand.vmem [shape: f32[1,5,32], index: 2, kind: output, shape index: {}]
  %s3 = sld [smem:[#allocation0]]
  $region30: #{tpu_custom_call.1} parent=0
    _
  %s5 = ssub.s32 1, %s3
  %s6 = scalar_select 0, %s5, %s3
  $region1: #{tpu_custom_call.1} parent=0
    #allocation2 [shape = 'u8[4096]{0}', space=vmem, size = 0x1000, scoped, tag = 'input window, operand 0, single buffered']
    #allocation3 [shape = 's32[1]{0}', space=sflag, size = 0x4, scoped, tag = 'scoped memory for tpu_custom_call.1']
    #allocation4 [shape = 'u8[4096]{0}', space=vmem, size = 0x1000, scoped, tag = 'input window, operand 1, single buffered']
    #allocation5 [shape = 's32[1]{0}', space=sflag, size = 0x4, scoped, tag = 'scoped memory for tpu_custom_call.1']
    %7 = vsyncpa [#allocation3], 0
    %8 = vsyncpa [#allocation5], 0
    // Predicated region
    $region2: #{tpu_custom_call.1} parent=1 // pred_check
      _
    $region3: #{tpu_custom_call.1} parent=1 // pred_check_branch
      %10 = sbr.rel (0) target = $region5
    $region4: #{tpu_custom_call.1} parent=1 // pred_region
      %s11 = sadd.s32 0, 0
      %13 = vsyncadd [#allocation3], 0
      %s14 = smul.addr %s11, 8
      %s15 = scalar_lea.hbm %s0, %s14
      %s17 = sshll.u32 %s15, 4
      %s18 = int_to_ptr.hbm [resolvable:$true] %s17
      %s19 = sshll.u32 [#allocation2], 4
      %s20 = int_to_ptr.vmem [resolvable:$true] %s19
      %22 = dma.hbm_to_vmem [thread:$0]  %s18, 128, %s20, [#allocation3]
    $region5: #{tpu_custom_call.1} parent=1 // pred_fallthru
      _
    // Predicated region
    $region6: #{tpu_custom_call.1} parent=1 // pred_check
      _
    $region7: #{tpu_custom_call.1} parent=1 // pred_check_branch
      %24 = sbr.rel (0) target = $region9
    $region8: #{tpu_custom_call.1} parent=1 // pred_region
      %s25 = sadd.s32 0, 0
      %27 = vsyncadd [#allocation5], 0
      %s28 = smul.addr %s25, 8
      %s29 = scalar_lea.hbm %s1, %s28
      %s31 = sshll.u32 %s29, 4
      %s32 = int_to_ptr.hbm [resolvable:$true] %s31
      %s33 = sshll.u32 [#allocation4], 4
      %s34 = int_to_ptr.vmem [resolvable:$true] %s33
      %36 = dma.hbm_to_vmem [thread:$0]  %s32, 128, %s34, [#allocation5]
    $region9: #{tpu_custom_call.1} parent=1 // pred_fallthru
      _
    // Predicated region
    $region10: #{tpu_custom_call.1} parent=1 // pred_check
      _
    $region11: #{tpu_custom_call.1} parent=1 // pred_check_branch
      %38 = sbr.rel (0) target = $region13
    $region12: #{tpu_custom_call.1} parent=1 // pred_region
      %40 = dma.done [#allocation3], 128
    $region13: #{tpu_custom_call.1} parent=1 // pred_fallthru
      _
    // Predicated region
    $region14: #{tpu_custom_call.1} parent=1 // pred_check
      _
    $region15: #{tpu_custom_call.1} parent=1 // pred_check_branch
      %42 = sbr.rel (0) target = $region17
    $region16: #{tpu_custom_call.1} parent=1 // pred_region
      %44 = dma.done [#allocation5], 128
    $region17: #{tpu_custom_call.1} parent=1 // pred_fallthru
      _
    %s45 = sadd.s32 0, 0
    %s46 = sadd.s32 0, 0
    %p47 = scmp.eq.s32.totalorder 0, 0
    // Predicated region
    $region18: #{tpu_custom_call.1} parent=1 // pred_check
      %p48 = pneg %p47
    $region19: #{tpu_custom_call.1} parent=1 // pred_check_branch
      %50 = sbr.rel (%p48) target = $region21
    $region20: #{tpu_custom_call.1} parent=1 // pred_region
      %vm51 = vcmask 258048
      %52 = vst.msk [vmem:[%s2] sm:$0x1f] %vm51, 0.0
    $region21: #{tpu_custom_call.1} parent=1 // pred_fallthru
      _
    %v53 = vld [vmem:[#allocation2] sm:$0xff]
    %vm54 = vcmask 64512
    %v56 = vsel %vm54, 1.0, 0
    %58 = vmatpush.msra.mxu0 0.0
    %59 = vmatpush.msra.mxu0 0.0
    %60 = vmatpush.msra.mxu0 0.0
    %61 = vmatpush.msra.mxu0 0.0
    %62 = vmatpush.msra.mxu0 0.0
    %63 = vmatpush.msra.mxu0 0.0
    %64 = vmatpush.msra.mxu0 0.0
    %65 = vmatpush.msra.mxu0 0.0
    %66 = vmatpush.msra.mxu0 0.0
    %67 = vmatpush.msra.mxu0 0.0
    %68 = vmatpush.msra.mxu0 0.0
    %69 = vmatpush.msra.mxu0 0.0
    %70 = vmatpush.msra.mxu0 0.0
    %71 = vmatpush.msra.mxu0 0.0
    %72 = vmatpush.msra.mxu0 0.0
    %v73 = vand.u32 %v53, 4294901760
    %74 = vmatpush.msra.mxu0 %v73
    %v75 = vand.u32 %v56, 4294901760
    %v76 = vsub.f32 %v56, %v75
    %v77 = vand.u32 %v76, 4294901760
    %v78 = vsub.f32 %v76, %v77
    %v79 = vand.u32 %v78, 4294901760
    %80 = vmatmul.f32.gmra.mxu0 %v79
    %v81 = vpop.f32.mrf.mxu0
    %v82 = vadd.f32 0.0, %v81
    %83 = vdwg.mxu0
    %84 = vmatpush.msra.mxu0 0.0
    %85 = vmatpush.msra.mxu0 0.0
    %86 = vmatpush.msra.mxu0 0.0
    %87 = vmatpush.msra.mxu0 0.0
    %88 = vmatpush.msra.mxu0 0.0
    %89 = vmatpush.msra.mxu0 0.0
    %90 = vmatpush.msra.mxu0 0.0
    %91 = vmatpush.msra.mxu0 0.0
    %92 = vmatpush.msra.mxu0 0.0
    %93 = vmatpush.msra.mxu0 0.0
    %94 = vmatpush.msra.mxu0 0.0
    %95 = vmatpush.msra.mxu0 0.0
    %96 = vmatpush.msra.mxu0 0.0
    %97 = vmatpush.msra.mxu0 0.0
    %98 = vmatpush.msra.mxu0 0.0
    %v99 = vand.u32 %v53, 4294901760
    %v100 = vsub.f32 %v53, %v99
    %v101 = vand.u32 %v100, 4294901760
    %v102 = vsub.f32 %v100, %v101
    %v103 = vand.u32 %v102, 4294901760
    %104 = vmatpush.msra.mxu0 %v103
    %v105 = vand.u32 %v56, 4294901760
    %106 = vmatmul.f32.gmra.mxu0 %v105
    %v107 = vpop.f32.mrf.mxu0
    %v108 = vadd.f32 %v82, %v107
    %109 = vdwg.mxu0
    %110 = vmatpush.msra.mxu0 0.0
    %111 = vmatpush.msra.mxu0 0.0
    %112 = vmatpush.msra.mxu0 0.0
    %113 = vmatpush.msra.mxu0 0.0
    %114 = vmatpush.msra.mxu0 0.0
    %115 = vmatpush.msra.mxu0 0.0
    %116 = vmatpush.msra.mxu0 0.0
    %117 = vmatpush.msra.mxu0 0.0
    %118 = vmatpush.msra.mxu0 0.0
    %119 = vmatpush.msra.mxu0 0.0
    %120 = vmatpush.msra.mxu0 0.0
    %121 = vmatpush.msra.mxu0 0.0
    %122 = vmatpush.msra.mxu0 0.0
    %123 = vmatpush.msra.mxu0 0.0
    %124 = vmatpush.msra.mxu0 0.0
    %v125 = vand.u32 %v53, 4294901760
    %v126 = vsub.f32 %v53, %v125
    %127 = vmatpush.msra.mxu0 %v126
    %v128 = vand.u32 %v56, 4294901760
    %v129 = vsub.f32 %v56, %v128
    %130 = vmatmul.f32.gmra.mxu0 %v129
    %v131 = vpop.f32.mrf.mxu0
    %v132 = vadd.f32 %v108, %v131
    %133 = vdwg.mxu0
    %134 = vmatpush.msra.mxu0 0.0
    %135 = vmatpush.msra.mxu0 0.0
    %136 = vmatpush.msra.mxu0 0.0
    %137 = vmatpush.msra.mxu0 0.0
    %138 = vmatpush.msra.mxu0 0.0
    %139 = vmatpush.msra.mxu0 0.0
    %140 = vmatpush.msra.mxu0 0.0
    %141 = vmatpush.msra.mxu0 0.0
    %142 = vmatpush.msra.mxu0 0.0
    %143 = vmatpush.msra.mxu0 0.0
    %144 = vmatpush.msra.mxu0 0.0
    %145 = vmatpush.msra.mxu0 0.0
    %146 = vmatpush.msra.mxu0 0.0
    %147 = vmatpush.msra.mxu0 0.0
    %148 = vmatpush.msra.mxu0 0.0
    %v149 = vand.u32 %v53, 4294901760
    %150 = vmatpush.msra.mxu0 %v149
    %v151 = vand.u32 %v56, 4294901760
    %v152 = vsub.f32 %v56, %v151
    %v153 = vand.u32 %v152, 4294901760
    %154 = vmatmul.f32.gmra.mxu0 %v153
    %v155 = vpop.f32.mrf.mxu0
    %v156 = vadd.f32 %v132, %v155
    %157 = vdwg.mxu0
    %158 = vmatpush.msra.mxu0 0.0
    %159 = vmatpush.msra.mxu0 0.0
    %160 = vmatpush.msra.mxu0 0.0
    %161 = vmatpush.msra.mxu0 0.0
    %162 = vmatpush.msra.mxu0 0.0
    %163 = vmatpush.msra.mxu0 0.0
    %164 = vmatpush.msra.mxu0 0.0
    %165 = vmatpush.msra.mxu0 0.0
    %166 = vmatpush.msra.mxu0 0.0
    %167 = vmatpush.msra.mxu0 0.0
    %168 = vmatpush.msra.mxu0 0.0
    %169 = vmatpush.msra.mxu0 0.0
    %170 = vmatpush.msra.mxu0 0.0
    %171 = vmatpush.msra.mxu0 0.0
    %172 = vmatpush.msra.mxu0 0.0
    %v173 = vand.u32 %v53, 4294901760
    %v174 = vsub.f32 %v53, %v173
    %v175 = vand.u32 %v174, 4294901760
    %176 = vmatpush.msra.mxu0 %v175
    %v177 = vand.u32 %v56, 4294901760
    %178 = vmatmul.f32.gmra.mxu0 %v177
    %v179 = vpop.f32.mrf.mxu0
    %v180 = vadd.f32 %v156, %v179
    %181 = vdwg.mxu0
    %182 = vmatpush.msra.mxu0 0.0
    %183 = vmatpush.msra.mxu0 0.0
    %184 = vmatpush.msra.mxu0 0.0
    %185 = vmatpush.msra.mxu0 0.0
    %186 = vmatpush.msra.mxu0 0.0
    %187 = vmatpush.msra.mxu0 0.0
    %188 = vmatpush.msra.mxu0 0.0
    %189 = vmatpush.msra.mxu0 0.0
    %190 = vmatpush.msra.mxu0 0.0
    %191 = vmatpush.msra.mxu0 0.0
    %192 = vmatpush.msra.mxu0 0.0
    %193 = vmatpush.msra.mxu0 0.0
    %194 = vmatpush.msra.mxu0 0.0
    %195 = vmatpush.msra.mxu0 0.0
    %196 = vmatpush.msra.mxu0 0.0
    %v197 = vand.u32 %v53, 4294901760
    %198 = vmatpush.msra.mxu0 %v197
    %v199 = vand.u32 %v56, 4294901760
    %200 = vmatmul.f32.gmra.mxu0 %v199
    %v201 = vpop.f32.mrf.mxu0
    %v202 = vadd.f32 %v180, %v201
    %203 = vdwg.mxu0
    %v204 = vadd.f32 %v202, 0.0
    %v205 = vld [vmem:[#allocation4] sm:$0xff]
    %206 = vmatpush.msra.mxu0 0.0
    %207 = vmatpush.msra.mxu0 0.0
    %208 = vmatpush.msra.mxu0 0.0
    %209 = vmatpush.msra.mxu0 0.0
    %210 = vmatpush.msra.mxu0 0.0
    %211 = vmatpush.msra.mxu0 0.0
    %212 = vmatpush.msra.mxu0 0.0
    %213 = vmatpush.msra.mxu0 0.0
    %214 = vmatpush.msra.mxu0 0.0
    %215 = vmatpush.msra.mxu0 0.0
    %216 = vmatpush.msra.mxu0 0.0
    %217 = vmatpush.msra.mxu0 0.0
    %218 = vmatpush.msra.mxu0 0.0
    %219 = vmatpush.msra.mxu0 0.0
    %220 = vmatpush.msra.mxu0 0.0
    %v221 = vand.u32 %v205, 4294901760
    %222 = vmatpush.msra.mxu0 %v221
    %v223 = vand.u32 %v56, 4294901760
    %v224 = vsub.f32 %v56, %v223
    %v225 = vand.u32 %v224, 4294901760
    %v226 = vsub.f32 %v224, %v225
    %v227 = vand.u32 %v226, 4294901760
    %228 = vmatmul.f32.gmra.mxu0 %v227
    %v229 = vpop.f32.mrf.mxu0
    %v230 = vadd.f32 0.0, %v229
    %231 = vdwg.mxu0
    %232 = vmatpush.msra.mxu0 0.0
    %233 = vmatpush.msra.mxu0 0.0
    %234 = vmatpush.msra.mxu0 0.0
    %235 = vmatpush.msra.mxu0 0.0
    %236 = vmatpush.msra.mxu0 0.0
    %237 = vmatpush.msra.mxu0 0.0
    %238 = vmatpush.msra.mxu0 0.0
    %239 = vmatpush.msra.mxu0 0.0
    %240 = vmatpush.msra.mxu0 0.0
    %241 = vmatpush.msra.mxu0 0.0
    %242 = vmatpush.msra.mxu0 0.0
    %243 = vmatpush.msra.mxu0 0.0
    %244 = vmatpush.msra.mxu0 0.0
    %245 = vmatpush.msra.mxu0 0.0
    %246 = vmatpush.msra.mxu0 0.0
    %v247 = vand.u32 %v205, 4294901760
    %v248 = vsub.f32 %v205, %v247
    %v249 = vand.u32 %v248, 4294901760
    %v250 = vsub.f32 %v248, %v249
    %v251 = vand.u32 %v250, 4294901760
    %252 = vmatpush.msra.mxu0 %v251
    %v253 = vand.u32 %v56, 4294901760
    %254 = vmatmul.f32.gmra.mxu0 %v253
    %v255 = vpop.f32.mrf.mxu0
    %v256 = vadd.f32 %v230, %v255
    %257 = vdwg.mxu0
    %258 = vmatpush.msra.mxu0 0.0
    %259 = vmatpush.msra.mxu0 0.0
    %260 = vmatpush.msra.mxu0 0.0
    %261 = vmatpush.msra.mxu0 0.0
    %262 = vmatpush.msra.mxu0 0.0
    %263 = vmatpush.msra.mxu0 0.0
    %264 = vmatpush.msra.mxu0 0.0
    %265 = vmatpush.msra.mxu0 0.0
    %266 = vmatpush.msra.mxu0 0.0
    %267 = vmatpush.msra.mxu0 0.0
    %268 = vmatpush.msra.mxu0 0.0
    %269 = vmatpush.msra.mxu0 0.0
    %270 = vmatpush.msra.mxu0 0.0
    %271 = vmatpush.msra.mxu0 0.0
    %272 = vmatpush.msra.mxu0 0.0
    %v273 = vand.u32 %v205, 4294901760
    %v274 = vsub.f32 %v205, %v273
    %275 = vmatpush.msra.mxu0 %v274
    %v276 = vand.u32 %v56, 4294901760
    %v277 = vsub.f32 %v56, %v276
    %278 = vmatmul.f32.gmra.mxu0 %v277
    %v279 = vpop.f32.mrf.mxu0
    %v280 = vadd.f32 %v256, %v279
    %281 = vdwg.mxu0
    %282 = vmatpush.msra.mxu0 0.0
    %283 = vmatpush.msra.mxu0 0.0
    %284 = vmatpush.msra.mxu0 0.0
    %285 = vmatpush.msra.mxu0 0.0
    %286 = vmatpush.msra.mxu0 0.0
    %287 = vmatpush.msra.mxu0 0.0
    %288 = vmatpush.msra.mxu0 0.0
    %289 = vmatpush.msra.mxu0 0.0
    %290 = vmatpush.msra.mxu0 0.0
    %291 = vmatpush.msra.mxu0 0.0
    %292 = vmatpush.msra.mxu0 0.0
    %293 = vmatpush.msra.mxu0 0.0
    %294 = vmatpush.msra.mxu0 0.0
    %295 = vmatpush.msra.mxu0 0.0
    %296 = vmatpush.msra.mxu0 0.0
    %v297 = vand.u32 %v205, 4294901760
    %298 = vmatpush.msra.mxu0 %v297
    %v299 = vand.u32 %v56, 4294901760
    %v300 = vsub.f32 %v56, %v299
    %v301 = vand.u32 %v300, 4294901760
    %302 = vmatmul.f32.gmra.mxu0 %v301
    %v303 = vpop.f32.mrf.mxu0
    %v304 = vadd.f32 %v280, %v303
    %305 = vdwg.mxu0
    %306 = vmatpush.msra.mxu0 0.0
    %307 = vmatpush.msra.mxu0 0.0
    %308 = vmatpush.msra.mxu0 0.0
    %309 = vmatpush.msra.mxu0 0.0
    %310 = vmatpush.msra.mxu0 0.0
    %311 = vmatpush.msra.mxu0 0.0
    %312 = vmatpush.msra.mxu0 0.0
    %313 = vmatpush.msra.mxu0 0.0
    %314 = vmatpush.msra.mxu0 0.0
    %315 = vmatpush.msra.mxu0 0.0
    %316 = vmatpush.msra.mxu0 0.0
    %317 = vmatpush.msra.mxu0 0.0
    %318 = vmatpush.msra.mxu0 0.0
    %319 = vmatpush.msra.mxu0 0.0
    %320 = vmatpush.msra.mxu0 0.0
    %v321 = vand.u32 %v205, 4294901760
    %v322 = vsub.f32 %v205, %v321
    %v323 = vand.u32 %v322, 4294901760
    %324 = vmatpush.msra.mxu0 %v323
    %v325 = vand.u32 %v56, 4294901760
    %326 = vmatmul.f32.gmra.mxu0 %v325
    %v327 = vpop.f32.mrf.mxu0
    %v328 = vadd.f32 %v304, %v327
    %329 = vdwg.mxu0
    %330 = vmatpush.msra.mxu0 0.0
    %331 = vmatpush.msra.mxu0 0.0
    %332 = vmatpush.msra.mxu0 0.0
    %333 = vmatpush.msra.mxu0 0.0
    %334 = vmatpush.msra.mxu0 0.0
    %335 = vmatpush.msra.mxu0 0.0
    %336 = vmatpush.msra.mxu0 0.0
    %337 = vmatpush.msra.mxu0 0.0
    %338 = vmatpush.msra.mxu0 0.0
    %339 = vmatpush.msra.mxu0 0.0
    %340 = vmatpush.msra.mxu0 0.0
    %341 = vmatpush.msra.mxu0 0.0
    %342 = vmatpush.msra.mxu0 0.0
    %343 = vmatpush.msra.mxu0 0.0
    %344 = vmatpush.msra.mxu0 0.0
    %v345 = vand.u32 %v205, 4294901760
    %346 = vmatpush.msra.mxu0 %v345
    %v347 = vand.u32 %v56, 4294901760
    %348 = vmatmul.f32.gmra.mxu0 %v347
    %v349 = vpop.f32.mrf.mxu0
    %v350 = vadd.f32 %v328, %v349
    %351 = vdwg.mxu0
    %v352 = vadd.f32 %v350, 0.0
    %v353 = vmul.f32 %v204, 0.125
    %v354 = vmul.f32 %v352, 0.125
    %v355 = vperm.slane %v353, 0
    %v356 = vsub.f32 %v53, %v355
    %v357 = vperm.slane %v354, 0
    %v358 = vsub.f32 %v205, %v357
    %v359 = vmul.f32 %v356, %v356
    %v360 = vmul.f32 %v358, %v358
    %361 = vmatpush.msra.mxu0 0.0
    %362 = vmatpush.msra.mxu0 0.0
    %363 = vmatpush.msra.mxu0 0.0
    %364 = vmatpush.msra.mxu0 0.0
    %365 = vmatpush.msra.mxu0 0.0
    %366 = vmatpush.msra.mxu0 0.0
    %367 = vmatpush.msra.mxu0 0.0
    %368 = vmatpush.msra.mxu0 0.0
    %369 = vmatpush.msra.mxu0 0.0
    %370 = vmatpush.msra.mxu0 0.0
    %371 = vmatpush.msra.mxu0 0.0
    %372 = vmatpush.msra.mxu0 0.0
    %373 = vmatpush.msra.mxu0 0.0
    %374 = vmatpush.msra.mxu0 0.0
    %375 = vmatpush.msra.mxu0 0.0
    %v376 = vand.u32 %v359, 4294901760
    %377 = vmatpush.msra.mxu0 %v376
    %v378 = vand.u32 %v56, 4294901760
    %v379 = vsub.f32 %v56, %v378
    %v380 = vand.u32 %v379, 4294901760
    %v381 = vsub.f32 %v379, %v380
    %v382 = vand.u32 %v381, 4294901760
    %383 = vmatmul.f32.gmra.mxu0 %v382
    %v384 = vpop.f32.mrf.mxu0
    %v385 = vadd.f32 0.0, %v384
    %386 = vdwg.mxu0
    %387 = vmatpush.msra.mxu0 0.0
    %388 = vmatpush.msra.mxu0 0.0
    %389 = vmatpush.msra.mxu0 0.0
    %390 = vmatpush.msra.mxu0 0.0
    %391 = vmatpush.msra.mxu0 0.0
    %392 = vmatpush.msra.mxu0 0.0
    %393 = vmatpush.msra.mxu0 0.0
    %394 = vmatpush.msra.mxu0 0.0
    %395 = vmatpush.msra.mxu0 0.0
    %396 = vmatpush.msra.mxu0 0.0
    %397 = vmatpush.msra.mxu0 0.0
    %398 = vmatpush.msra.mxu0 0.0
    %399 = vmatpush.msra.mxu0 0.0
    %400 = vmatpush.msra.mxu0 0.0
    %401 = vmatpush.msra.mxu0 0.0
    %v402 = vand.u32 %v359, 4294901760
    %v403 = vsub.f32 %v359, %v402
    %v404 = vand.u32 %v403, 4294901760
    %v405 = vsub.f32 %v403, %v404
    %v406 = vand.u32 %v405, 4294901760
    %407 = vmatpush.msra.mxu0 %v406
    %v408 = vand.u32 %v56, 4294901760
    %409 = vmatmul.f32.gmra.mxu0 %v408
    %v410 = vpop.f32.mrf.mxu0
    %v411 = vadd.f32 %v385, %v410
    %412 = vdwg.mxu0
    %413 = vmatpush.msra.mxu0 0.0
    %414 = vmatpush.msra.mxu0 0.0
    %415 = vmatpush.msra.mxu0 0.0
    %416 = vmatpush.msra.mxu0 0.0
    %417 = vmatpush.msra.mxu0 0.0
    %418 = vmatpush.msra.mxu0 0.0
    %419 = vmatpush.msra.mxu0 0.0
    %420 = vmatpush.msra.mxu0 0.0
    %421 = vmatpush.msra.mxu0 0.0
    %422 = vmatpush.msra.mxu0 0.0
    %423 = vmatpush.msra.mxu0 0.0
    %424 = vmatpush.msra.mxu0 0.0
    %425 = vmatpush.msra.mxu0 0.0
    %426 = vmatpush.msra.mxu0 0.0
    %427 = vmatpush.msra.mxu0 0.0
    %v428 = vand.u32 %v359, 4294901760
    %v429 = vsub.f32 %v359, %v428
    %430 = vmatpush.msra.mxu0 %v429
    %v431 = vand.u32 %v56, 4294901760
    %v432 = vsub.f32 %v56, %v431
    %433 = vmatmul.f32.gmra.mxu0 %v432
    %v434 = vpop.f32.mrf.mxu0
    %v435 = vadd.f32 %v411, %v434
    %436 = vdwg.mxu0
    %437 = vmatpush.msra.mxu0 0.0
    %438 = vmatpush.msra.mxu0 0.0
    %439 = vmatpush.msra.mxu0 0.0
    %440 = vmatpush.msra.mxu0 0.0
    %441 = vmatpush.msra.mxu0 0.0
    %442 = vmatpush.msra.mxu0 0.0
    %443 = vmatpush.msra.mxu0 0.0
    %444 = vmatpush.msra.mxu0 0.0
    %445 = vmatpush.msra.mxu0 0.0
    %446 = vmatpush.msra.mxu0 0.0
    %447 = vmatpush.msra.mxu0 0.0
    %448 = vmatpush.msra.mxu0 0.0
    %449 = vmatpush.msra.mxu0 0.0
    %450 = vmatpush.msra.mxu0 0.0
    %451 = vmatpush.msra.mxu0 0.0
    %v452 = vand.u32 %v359, 4294901760
    %453 = vmatpush.msra.mxu0 %v452
    %v454 = vand.u32 %v56, 4294901760
    %v455 = vsub.f32 %v56, %v454
    %v456 = vand.u32 %v455, 4294901760
    %457 = vmatmul.f32.gmra.mxu0 %v456
    %v458 = vpop.f32.mrf.mxu0
    %v459 = vadd.f32 %v435, %v458
    %460 = vdwg.mxu0
    %461 = vmatpush.msra.mxu0 0.0
    %462 = vmatpush.msra.mxu0 0.0
    %463 = vmatpush.msra.mxu0 0.0
    %464 = vmatpush.msra.mxu0 0.0
    %465 = vmatpush.msra.mxu0 0.0
    %466 = vmatpush.msra.mxu0 0.0
    %467 = vmatpush.msra.mxu0 0.0
    %468 = vmatpush.msra.mxu0 0.0
    %469 = vmatpush.msra.mxu0 0.0
    %470 = vmatpush.msra.mxu0 0.0
    %471 = vmatpush.msra.mxu0 0.0
    %472 = vmatpush.msra.mxu0 0.0
    %473 = vmatpush.msra.mxu0 0.0
    %474 = vmatpush.msra.mxu0 0.0
    %475 = vmatpush.msra.mxu0 0.0
    %v476 = vand.u32 %v359, 4294901760
    %v477 = vsub.f32 %v359, %v476
    %v478 = vand.u32 %v477, 4294901760
    %479 = vmatpush.msra.mxu0 %v478
    %v480 = vand.u32 %v56, 4294901760
    %481 = vmatmul.f32.gmra.mxu0 %v480
    %v482 = vpop.f32.mrf.mxu0
    %v483 = vadd.f32 %v459, %v482
    %484 = vdwg.mxu0
    %485 = vmatpush.msra.mxu0 0.0
    %486 = vmatpush.msra.mxu0 0.0
    %487 = vmatpush.msra.mxu0 0.0
    %488 = vmatpush.msra.mxu0 0.0
    %489 = vmatpush.msra.mxu0 0.0
    %490 = vmatpush.msra.mxu0 0.0
    %491 = vmatpush.msra.mxu0 0.0
    %492 = vmatpush.msra.mxu0 0.0
    %493 = vmatpush.msra.mxu0 0.0
    %494 = vmatpush.msra.mxu0 0.0
    %495 = vmatpush.msra.mxu0 0.0
    %496 = vmatpush.msra.mxu0 0.0
    %497 = vmatpush.msra.mxu0 0.0
    %498 = vmatpush.msra.mxu0 0.0
    %499 = vmatpush.msra.mxu0 0.0
    %v500 = vand.u32 %v359, 4294901760
    %501 = vmatpush.msra.mxu0 %v500
    %v502 = vand.u32 %v56, 4294901760
    %503 = vmatmul.f32.gmra.mxu0 %v502
    %v504 = vpop.f32.mrf.mxu0
    %v505 = vadd.f32 %v483, %v504
    %506 = vdwg.mxu0
    %507 = vmatpush.msra.mxu0 0.0
    %508 = vmatpush.msra.mxu0 0.0
    %509 = vmatpush.msra.mxu0 0.0
    %510 = vmatpush.msra.mxu0 0.0
    %511 = vmatpush.msra.mxu0 0.0
    %512 = vmatpush.msra.mxu0 0.0
    %513 = vmatpush.msra.mxu0 0.0
    %514 = vmatpush.msra.mxu0 0.0
    %515 = vmatpush.msra.mxu0 0.0
    %516 = vmatpush.msra.mxu0 0.0
    %517 = vmatpush.msra.mxu0 0.0
    %518 = vmatpush.msra.mxu0 0.0
    %519 = vmatpush.msra.mxu0 0.0
    %520 = vmatpush.msra.mxu0 0.0
    %521 = vmatpush.msra.mxu0 0.0
    %v522 = vand.u32 %v360, 4294901760
    %523 = vmatpush.msra.mxu0 %v522
    %v524 = vand.u32 %v56, 4294901760
    %v525 = vsub.f32 %v56, %v524
    %v526 = vand.u32 %v525, 4294901760
    %v527 = vsub.f32 %v525, %v526
    %v528 = vand.u32 %v527, 4294901760
    %529 = vmatmul.f32.gmra.mxu0 %v528
    %v530 = vpop.f32.mrf.mxu0
    %v531 = vadd.f32 0.0, %v530
    %532 = vdwg.mxu0
    %533 = vmatpush.msra.mxu0 0.0
    %534 = vmatpush.msra.mxu0 0.0
    %535 = vmatpush.msra.mxu0 0.0
    %536 = vmatpush.msra.mxu0 0.0
    %537 = vmatpush.msra.mxu0 0.0
    %538 = vmatpush.msra.mxu0 0.0
    %539 = vmatpush.msra.mxu0 0.0
    %540 = vmatpush.msra.mxu0 0.0
    %541 = vmatpush.msra.mxu0 0.0
    %542 = vmatpush.msra.mxu0 0.0
    %543 = vmatpush.msra.mxu0 0.0
    %544 = vmatpush.msra.mxu0 0.0
    %545 = vmatpush.msra.mxu0 0.0
    %546 = vmatpush.msra.mxu0 0.0
    %547 = vmatpush.msra.mxu0 0.0
    %v548 = vand.u32 %v360, 4294901760
    %v549 = vsub.f32 %v360, %v548
    %v550 = vand.u32 %v549, 4294901760
    %v551 = vsub.f32 %v549, %v550
    %v552 = vand.u32 %v551, 4294901760
    %553 = vmatpush.msra.mxu0 %v552
    %v554 = vand.u32 %v56, 4294901760
    %555 = vmatmul.f32.gmra.mxu0 %v554
    %v556 = vpop.f32.mrf.mxu0
    %v557 = vadd.f32 %v531, %v556
    %558 = vdwg.mxu0
    %559 = vmatpush.msra.mxu0 0.0
    %560 = vmatpush.msra.mxu0 0.0
    %561 = vmatpush.msra.mxu0 0.0
    %562 = vmatpush.msra.mxu0 0.0
    %563 = vmatpush.msra.mxu0 0.0
    %564 = vmatpush.msra.mxu0 0.0
    %565 = vmatpush.msra.mxu0 0.0
    %566 = vmatpush.msra.mxu0 0.0
    %567 = vmatpush.msra.mxu0 0.0
    %568 = vmatpush.msra.mxu0 0.0
    %569 = vmatpush.msra.mxu0 0.0
    %570 = vmatpush.msra.mxu0 0.0
    %571 = vmatpush.msra.mxu0 0.0
    %572 = vmatpush.msra.mxu0 0.0
    %573 = vmatpush.msra.mxu0 0.0
    %v574 = vand.u32 %v360, 4294901760
    %v575 = vsub.f32 %v360, %v574
    %576 = vmatpush.msra.mxu0 %v575
    %v577 = vand.u32 %v56, 4294901760
    %v578 = vsub.f32 %v56, %v577
    %579 = vmatmul.f32.gmra.mxu0 %v578
    %v580 = vpop.f32.mrf.mxu0
    %v581 = vadd.f32 %v557, %v580
    %582 = vdwg.mxu0
    %583 = vmatpush.msra.mxu0 0.0
    %584 = vmatpush.msra.mxu0 0.0
    %585 = vmatpush.msra.mxu0 0.0
    %586 = vmatpush.msra.mxu0 0.0
    %587 = vmatpush.msra.mxu0 0.0
    %588 = vmatpush.msra.mxu0 0.0
    %589 = vmatpush.msra.mxu0 0.0
    %590 = vmatpush.msra.mxu0 0.0
    %591 = vmatpush.msra.mxu0 0.0
    %592 = vmatpush.msra.mxu0 0.0
    %593 = vmatpush.msra.mxu0 0.0
    %594 = vmatpush.msra.mxu0 0.0
    %595 = vmatpush.msra.mxu0 0.0
    %596 = vmatpush.msra.mxu0 0.0
    %597 = vmatpush.msra.mxu0 0.0
    %v598 = vand.u32 %v360, 4294901760
    %599 = vmatpush.msra.mxu0 %v598
    %v600 = vand.u32 %v56, 4294901760
    %v601 = vsub.f32 %v56, %v600
    %v602 = vand.u32 %v601, 4294901760
    %603 = vmatmul.f32.gmra.mxu0 %v602
    %v604 = vpop.f32.mrf.mxu0
    %v605 = vadd.f32 %v581, %v604
    %606 = vdwg.mxu0
    %607 = vmatpush.msra.mxu0 0.0
    %608 = vmatpush.msra.mxu0 0.0
    %609 = vmatpush.msra.mxu0 0.0
    %610 = vmatpush.msra.mxu0 0.0
    %611 = vmatpush.msra.mxu0 0.0
    %612 = vmatpush.msra.mxu0 0.0
    %613 = vmatpush.msra.mxu0 0.0
    %614 = vmatpush.msra.mxu0 0.0
    %615 = vmatpush.msra.mxu0 0.0
    %616 = vmatpush.msra.mxu0 0.0
    %617 = vmatpush.msra.mxu0 0.0
    %618 = vmatpush.msra.mxu0 0.0
    %619 = vmatpush.msra.mxu0 0.0
    %620 = vmatpush.msra.mxu0 0.0
    %621 = vmatpush.msra.mxu0 0.0
    %v622 = vand.u32 %v360, 4294901760
    %v623 = vsub.f32 %v360, %v622
    %v624 = vand.u32 %v623, 4294901760
    %625 = vmatpush.msra.mxu0 %v624
    %v626 = vand.u32 %v56, 4294901760
    %627 = vmatmul.f32.gmra.mxu0 %v626
    %v628 = vpop.f32.mrf.mxu0
    %v629 = vadd.f32 %v605, %v628
    %630 = vdwg.mxu0
    %631 = vmatpush.msra.mxu0 0.0
    %632 = vmatpush.msra.mxu0 0.0
    %633 = vmatpush.msra.mxu0 0.0
    %634 = vmatpush.msra.mxu0 0.0
    %635 = vmatpush.msra.mxu0 0.0
    %636 = vmatpush.msra.mxu0 0.0
    %637 = vmatpush.msra.mxu0 0.0
    %638 = vmatpush.msra.mxu0 0.0
    %639 = vmatpush.msra.mxu0 0.0
    %640 = vmatpush.msra.mxu0 0.0
    %641 = vmatpush.msra.mxu0 0.0
    %642 = vmatpush.msra.mxu0 0.0
    %643 = vmatpush.msra.mxu0 0.0
    %644 = vmatpush.msra.mxu0 0.0
    %645 = vmatpush.msra.mxu0 0.0
    %v646 = vand.u32 %v360, 4294901760
    %647 = vmatpush.msra.mxu0 %v646
    %v648 = vand.u32 %v56, 4294901760
    %649 = vmatmul.f32.gmra.mxu0 %v648
    %v650 = vpop.f32.mrf.mxu0
    %v651 = vadd.f32 %v629, %v650
    %652 = vdwg.mxu0
    %v653 = vmul.f32 %v359, %v356
    %v654 = vmul.f32 %v360, %v358
    %655 = vmatpush.msra.mxu0 0.0
    %656 = vmatpush.msra.mxu0 0.0
    %657 = vmatpush.msra.mxu0 0.0
    %658 = vmatpush.msra.mxu0 0.0
    %659 = vmatpush.msra.mxu0 0.0
    %660 = vmatpush.msra.mxu0 0.0
    %661 = vmatpush.msra.mxu0 0.0
    %662 = vmatpush.msra.mxu0 0.0
    %663 = vmatpush.msra.mxu0 0.0
    %664 = vmatpush.msra.mxu0 0.0
    %665 = vmatpush.msra.mxu0 0.0
    %666 = vmatpush.msra.mxu0 0.0
    %667 = vmatpush.msra.mxu0 0.0
    %668 = vmatpush.msra.mxu0 0.0
    %669 = vmatpush.msra.mxu0 0.0
    %v670 = vand.u32 %v653, 4294901760
    %671 = vmatpush.msra.mxu0 %v670
    %v672 = vand.u32 %v56, 4294901760
    %v673 = vsub.f32 %v56, %v672
    %v674 = vand.u32 %v673, 4294901760
    %v675 = vsub.f32 %v673, %v674
    %v676 = vand.u32 %v675, 4294901760
    %677 = vmatmul.f32.gmra.mxu0 %v676
    %v678 = vpop.f32.mrf.mxu0
    %v679 = vadd.f32 0.0, %v678
    %680 = vdwg.mxu0
    %681 = vmatpush.msra.mxu0 0.0
    %682 = vmatpush.msra.mxu0 0.0
    %683 = vmatpush.msra.mxu0 0.0
    %684 = vmatpush.msra.mxu0 0.0
    %685 = vmatpush.msra.mxu0 0.0
    %686 = vmatpush.msra.mxu0 0.0
    %687 = vmatpush.msra.mxu0 0.0
    %688 = vmatpush.msra.mxu0 0.0
    %689 = vmatpush.msra.mxu0 0.0
    %690 = vmatpush.msra.mxu0 0.0
    %691 = vmatpush.msra.mxu0 0.0
    %692 = vmatpush.msra.mxu0 0.0
    %693 = vmatpush.msra.mxu0 0.0
    %694 = vmatpush.msra.mxu0 0.0
    %695 = vmatpush.msra.mxu0 0.0
    %v696 = vand.u32 %v653, 4294901760
    %v697 = vsub.f32 %v653, %v696
    %v698 = vand.u32 %v697, 4294901760
    %v699 = vsub.f32 %v697, %v698
    %v700 = vand.u32 %v699, 4294901760
    %701 = vmatpush.msra.mxu0 %v700
    %v702 = vand.u32 %v56, 4294901760
    %703 = vmatmul.f32.gmra.mxu0 %v702
    %v704 = vpop.f32.mrf.mxu0
    %v705 = vadd.f32 %v679, %v704
    %706 = vdwg.mxu0
    %707 = vmatpush.msra.mxu0 0.0
    %708 = vmatpush.msra.mxu0 0.0
    %709 = vmatpush.msra.mxu0 0.0
    %710 = vmatpush.msra.mxu0 0.0
    %711 = vmatpush.msra.mxu0 0.0
    %712 = vmatpush.msra.mxu0 0.0
    %713 = vmatpush.msra.mxu0 0.0
    %714 = vmatpush.msra.mxu0 0.0
    %715 = vmatpush.msra.mxu0 0.0
    %716 = vmatpush.msra.mxu0 0.0
    %717 = vmatpush.msra.mxu0 0.0
    %718 = vmatpush.msra.mxu0 0.0
    %719 = vmatpush.msra.mxu0 0.0
    %720 = vmatpush.msra.mxu0 0.0
    %721 = vmatpush.msra.mxu0 0.0
    %v722 = vand.u32 %v653, 4294901760
    %v723 = vsub.f32 %v653, %v722
    %724 = vmatpush.msra.mxu0 %v723
    %v725 = vand.u32 %v56, 4294901760
    %v726 = vsub.f32 %v56, %v725
    %727 = vmatmul.f32.gmra.mxu0 %v726
    %v728 = vpop.f32.mrf.mxu0
    %v729 = vadd.f32 %v705, %v728
    %730 = vdwg.mxu0
    %731 = vmatpush.msra.mxu0 0.0
    %732 = vmatpush.msra.mxu0 0.0
    %733 = vmatpush.msra.mxu0 0.0
    %734 = vmatpush.msra.mxu0 0.0
    %735 = vmatpush.msra.mxu0 0.0
    %736 = vmatpush.msra.mxu0 0.0
    %737 = vmatpush.msra.mxu0 0.0
    %738 = vmatpush.msra.mxu0 0.0
    %739 = vmatpush.msra.mxu0 0.0
    %740 = vmatpush.msra.mxu0 0.0
    %741 = vmatpush.msra.mxu0 0.0
    %742 = vmatpush.msra.mxu0 0.0
    %743 = vmatpush.msra.mxu0 0.0
    %744 = vmatpush.msra.mxu0 0.0
    %745 = vmatpush.msra.mxu0 0.0
    %v746 = vand.u32 %v653, 4294901760
    %747 = vmatpush.msra.mxu0 %v746
    %v748 = vand.u32 %v56, 4294901760
    %v749 = vsub.f32 %v56, %v748
    %v750 = vand.u32 %v749, 4294901760
    %751 = vmatmul.f32.gmra.mxu0 %v750
    %v752 = vpop.f32.mrf.mxu0
    %v753 = vadd.f32 %v729, %v752
    %754 = vdwg.mxu0
    %755 = vmatpush.msra.mxu0 0.0
    %756 = vmatpush.msra.mxu0 0.0
    %757 = vmatpush.msra.mxu0 0.0
    %758 = vmatpush.msra.mxu0 0.0
    %759 = vmatpush.msra.mxu0 0.0
    %760 = vmatpush.msra.mxu0 0.0
    %761 = vmatpush.msra.mxu0 0.0
    %762 = vmatpush.msra.mxu0 0.0
    %763 = vmatpush.msra.mxu0 0.0
    %764 = vmatpush.msra.mxu0 0.0
    %765 = vmatpush.msra.mxu0 0.0
    %766 = vmatpush.msra.mxu0 0.0
    %767 = vmatpush.msra.mxu0 0.0
    %768 = vmatpush.msra.mxu0 0.0
    %769 = vmatpush.msra.mxu0 0.0
    %v770 = vand.u32 %v653, 4294901760
    %v771 = vsub.f32 %v653, %v770
    %v772 = vand.u32 %v771, 4294901760
    %773 = vmatpush.msra.mxu0 %v772
    %v774 = vand.u32 %v56, 4294901760
    %775 = vmatmul.f32.gmra.mxu0 %v774
    %v776 = vpop.f32.mrf.mxu0
    %v777 = vadd.f32 %v753, %v776
    %778 = vdwg.mxu0
    %779 = vmatpush.msra.mxu0 0.0
    %780 = vmatpush.msra.mxu0 0.0
    %781 = vmatpush.msra.mxu0 0.0
    %782 = vmatpush.msra.mxu0 0.0
    %783 = vmatpush.msra.mxu0 0.0
    %784 = vmatpush.msra.mxu0 0.0
    %785 = vmatpush.msra.mxu0 0.0
    %786 = vmatpush.msra.mxu0 0.0
    %787 = vmatpush.msra.mxu0 0.0
    %788 = vmatpush.msra.mxu0 0.0
    %789 = vmatpush.msra.mxu0 0.0
    %790 = vmatpush.msra.mxu0 0.0
    %791 = vmatpush.msra.mxu0 0.0
    %792 = vmatpush.msra.mxu0 0.0
    %793 = vmatpush.msra.mxu0 0.0
    %v794 = vand.u32 %v653, 4294901760
    %795 = vmatpush.msra.mxu0 %v794
    %v796 = vand.u32 %v56, 4294901760
    %797 = vmatmul.f32.gmra.mxu0 %v796
    %v798 = vpop.f32.mrf.mxu0
    %v799 = vadd.f32 %v777, %v798
    %800 = vdwg.mxu0
    %801 = vmatpush.msra.mxu0 0.0
    %802 = vmatpush.msra.mxu0 0.0
    %803 = vmatpush.msra.mxu0 0.0
    %804 = vmatpush.msra.mxu0 0.0
    %805 = vmatpush.msra.mxu0 0.0
    %806 = vmatpush.msra.mxu0 0.0
    %807 = vmatpush.msra.mxu0 0.0
    %808 = vmatpush.msra.mxu0 0.0
    %809 = vmatpush.msra.mxu0 0.0
    %810 = vmatpush.msra.mxu0 0.0
    %811 = vmatpush.msra.mxu0 0.0
    %812 = vmatpush.msra.mxu0 0.0
    %813 = vmatpush.msra.mxu0 0.0
    %814 = vmatpush.msra.mxu0 0.0
    %815 = vmatpush.msra.mxu0 0.0
    %v816 = vand.u32 %v654, 4294901760
    %817 = vmatpush.msra.mxu0 %v816
    %v818 = vand.u32 %v56, 4294901760
    %v819 = vsub.f32 %v56, %v818
    %v820 = vand.u32 %v819, 4294901760
    %v821 = vsub.f32 %v819, %v820
    %v822 = vand.u32 %v821, 4294901760
    %823 = vmatmul.f32.gmra.mxu0 %v822
    %v824 = vpop.f32.mrf.mxu0
    %v825 = vadd.f32 0.0, %v824
    %826 = vdwg.mxu0
    %827 = vmatpush.msra.mxu0 0.0
    %828 = vmatpush.msra.mxu0 0.0
    %829 = vmatpush.msra.mxu0 0.0
    %830 = vmatpush.msra.mxu0 0.0
    %831 = vmatpush.msra.mxu0 0.0
    %832 = vmatpush.msra.mxu0 0.0
    %833 = vmatpush.msra.mxu0 0.0
    %834 = vmatpush.msra.mxu0 0.0
    %835 = vmatpush.msra.mxu0 0.0
    %836 = vmatpush.msra.mxu0 0.0
    %837 = vmatpush.msra.mxu0 0.0
    %838 = vmatpush.msra.mxu0 0.0
    %839 = vmatpush.msra.mxu0 0.0
    %840 = vmatpush.msra.mxu0 0.0
    %841 = vmatpush.msra.mxu0 0.0
    %v842 = vand.u32 %v654, 4294901760
    %v843 = vsub.f32 %v654, %v842
    %v844 = vand.u32 %v843, 4294901760
    %v845 = vsub.f32 %v843, %v844
    %v846 = vand.u32 %v845, 4294901760
    %847 = vmatpush.msra.mxu0 %v846
    %v848 = vand.u32 %v56, 4294901760
    %849 = vmatmul.f32.gmra.mxu0 %v848
    %v850 = vpop.f32.mrf.mxu0
    %v851 = vadd.f32 %v825, %v850
    %852 = vdwg.mxu0
    %853 = vmatpush.msra.mxu0 0.0
    %854 = vmatpush.msra.mxu0 0.0
    %855 = vmatpush.msra.mxu0 0.0
    %856 = vmatpush.msra.mxu0 0.0
    %857 = vmatpush.msra.mxu0 0.0
    %858 = vmatpush.msra.mxu0 0.0
    %859 = vmatpush.msra.mxu0 0.0
    %860 = vmatpush.msra.mxu0 0.0
    %861 = vmatpush.msra.mxu0 0.0
    %862 = vmatpush.msra.mxu0 0.0
    %863 = vmatpush.msra.mxu0 0.0
    %864 = vmatpush.msra.mxu0 0.0
    %865 = vmatpush.msra.mxu0 0.0
    %866 = vmatpush.msra.mxu0 0.0
    %867 = vmatpush.msra.mxu0 0.0
    %v868 = vand.u32 %v654, 4294901760
    %v869 = vsub.f32 %v654, %v868
    %870 = vmatpush.msra.mxu0 %v869
    %v871 = vand.u32 %v56, 4294901760
    %v872 = vsub.f32 %v56, %v871
    %873 = vmatmul.f32.gmra.mxu0 %v872
    %v874 = vpop.f32.mrf.mxu0
    %v875 = vadd.f32 %v851, %v874
    %876 = vdwg.mxu0
    %877 = vmatpush.msra.mxu0 0.0
    %878 = vmatpush.msra.mxu0 0.0
    %879 = vmatpush.msra.mxu0 0.0
    %880 = vmatpush.msra.mxu0 0.0
    %881 = vmatpush.msra.mxu0 0.0
    %882 = vmatpush.msra.mxu0 0.0
    %883 = vmatpush.msra.mxu0 0.0
    %884 = vmatpush.msra.mxu0 0.0
    %885 = vmatpush.msra.mxu0 0.0
    %886 = vmatpush.msra.mxu0 0.0
    %887 = vmatpush.msra.mxu0 0.0
    %888 = vmatpush.msra.mxu0 0.0
    %889 = vmatpush.msra.mxu0 0.0
    %890 = vmatpush.msra.mxu0 0.0
    %891 = vmatpush.msra.mxu0 0.0
    %v892 = vand.u32 %v654, 4294901760
    %893 = vmatpush.msra.mxu0 %v892
    %v894 = vand.u32 %v56, 4294901760
    %v895 = vsub.f32 %v56, %v894
    %v896 = vand.u32 %v895, 4294901760
    %897 = vmatmul.f32.gmra.mxu0 %v896
    %v898 = vpop.f32.mrf.mxu0
    %v899 = vadd.f32 %v875, %v898
    %900 = vdwg.mxu0
    %901 = vmatpush.msra.mxu0 0.0
    %902 = vmatpush.msra.mxu0 0.0
    %903 = vmatpush.msra.mxu0 0.0
    %904 = vmatpush.msra.mxu0 0.0
    %905 = vmatpush.msra.mxu0 0.0
    %906 = vmatpush.msra.mxu0 0.0
    %907 = vmatpush.msra.mxu0 0.0
    %908 = vmatpush.msra.mxu0 0.0
    %909 = vmatpush.msra.mxu0 0.0
    %910 = vmatpush.msra.mxu0 0.0
    %911 = vmatpush.msra.mxu0 0.0
    %912 = vmatpush.msra.mxu0 0.0
    %913 = vmatpush.msra.mxu0 0.0
    %914 = vmatpush.msra.mxu0 0.0
    %915 = vmatpush.msra.mxu0 0.0
    %v916 = vand.u32 %v654, 4294901760
    %v917 = vsub.f32 %v654, %v916
    %v918 = vand.u32 %v917, 4294901760
    %919 = vmatpush.msra.mxu0 %v918
    %v920 = vand.u32 %v56, 4294901760
    %921 = vmatmul.f32.gmra.mxu0 %v920
    %v922 = vpop.f32.mrf.mxu0
    %v923 = vadd.f32 %v899, %v922
    %924 = vdwg.mxu0
    %925 = vmatpush.msra.mxu0 0.0
    %926 = vmatpush.msra.mxu0 0.0
    %927 = vmatpush.msra.mxu0 0.0
    %928 = vmatpush.msra.mxu0 0.0
    %929 = vmatpush.msra.mxu0 0.0
    %930 = vmatpush.msra.mxu0 0.0
    %931 = vmatpush.msra.mxu0 0.0
    %932 = vmatpush.msra.mxu0 0.0
    %933 = vmatpush.msra.mxu0 0.0
    %934 = vmatpush.msra.mxu0 0.0
    %935 = vmatpush.msra.mxu0 0.0
    %936 = vmatpush.msra.mxu0 0.0
    %937 = vmatpush.msra.mxu0 0.0
    %938 = vmatpush.msra.mxu0 0.0
    %939 = vmatpush.msra.mxu0 0.0
    %v940 = vand.u32 %v654, 4294901760
    %941 = vmatpush.msra.mxu0 %v940
    %v942 = vand.u32 %v56, 4294901760
    %943 = vmatmul.f32.gmra.mxu0 %v942
    %v944 = vpop.f32.mrf.mxu0
    %v945 = vadd.f32 %v923, %v944
    %946 = vdwg.mxu0
    %v947 = vmul.f32 %v653, %v356
    %v948 = vmul.f32 %v654, %v358
    %949 = vmatpush.msra.mxu0 0.0
    %950 = vmatpush.msra.mxu0 0.0
    %951 = vmatpush.msra.mxu0 0.0
    %952 = vmatpush.msra.mxu0 0.0
    %953 = vmatpush.msra.mxu0 0.0
    %954 = vmatpush.msra.mxu0 0.0
    %955 = vmatpush.msra.mxu0 0.0
    %956 = vmatpush.msra.mxu0 0.0
    %957 = vmatpush.msra.mxu0 0.0
    %958 = vmatpush.msra.mxu0 0.0
    %959 = vmatpush.msra.mxu0 0.0
    %960 = vmatpush.msra.mxu0 0.0
    %961 = vmatpush.msra.mxu0 0.0
    %962 = vmatpush.msra.mxu0 0.0
    %963 = vmatpush.msra.mxu0 0.0
    %v964 = vand.u32 %v947, 4294901760
    %965 = vmatpush.msra.mxu0 %v964
    %v966 = vand.u32 %v56, 4294901760
    %v967 = vsub.f32 %v56, %v966
    %v968 = vand.u32 %v967, 4294901760
    %v969 = vsub.f32 %v967, %v968
    %v970 = vand.u32 %v969, 4294901760
    %971 = vmatmul.f32.gmra.mxu0 %v970
    %v972 = vpop.f32.mrf.mxu0
    %v973 = vadd.f32 0.0, %v972
    %974 = vdwg.mxu0
    %975 = vmatpush.msra.mxu0 0.0
    %976 = vmatpush.msra.mxu0 0.0
    %977 = vmatpush.msra.mxu0 0.0
    %978 = vmatpush.msra.mxu0 0.0
    %979 = vmatpush.msra.mxu0 0.0
    %980 = vmatpush.msra.mxu0 0.0
    %981 = vmatpush.msra.mxu0 0.0
    %982 = vmatpush.msra.mxu0 0.0
    %983 = vmatpush.msra.mxu0 0.0
    %984 = vmatpush.msra.mxu0 0.0
    %985 = vmatpush.msra.mxu0 0.0
    %986 = vmatpush.msra.mxu0 0.0
    %987 = vmatpush.msra.mxu0 0.0
    %988 = vmatpush.msra.mxu0 0.0
    %989 = vmatpush.msra.mxu0 0.0
    %v990 = vand.u32 %v947, 4294901760
    %v991 = vsub.f32 %v947, %v990
    %v992 = vand.u32 %v991, 4294901760
    %v993 = vsub.f32 %v991, %v992
    %v994 = vand.u32 %v993, 4294901760
    %995 = vmatpush.msra.mxu0 %v994
    %v996 = vand.u32 %v56, 4294901760
    %997 = vmatmul.f32.gmra.mxu0 %v996
    %v998 = vpop.f32.mrf.mxu0
    %v999 = vadd.f32 %v973, %v998
    %1000 = vdwg.mxu0
    %1001 = vmatpush.msra.mxu0 0.0
    %1002 = vmatpush.msra.mxu0 0.0
    %1003 = vmatpush.msra.mxu0 0.0
    %1004 = vmatpush.msra.mxu0 0.0
    %1005 = vmatpush.msra.mxu0 0.0
    %1006 = vmatpush.msra.mxu0 0.0
    %1007 = vmatpush.msra.mxu0 0.0
    %1008 = vmatpush.msra.mxu0 0.0
    %1009 = vmatpush.msra.mxu0 0.0
    %1010 = vmatpush.msra.mxu0 0.0
    %1011 = vmatpush.msra.mxu0 0.0
    %1012 = vmatpush.msra.mxu0 0.0
    %1013 = vmatpush.msra.mxu0 0.0
    %1014 = vmatpush.msra.mxu0 0.0
    %1015 = vmatpush.msra.mxu0 0.0
    %v1016 = vand.u32 %v947, 4294901760
    %v1017 = vsub.f32 %v947, %v1016
    %1018 = vmatpush.msra.mxu0 %v1017
    %v1019 = vand.u32 %v56, 4294901760
    %v1020 = vsub.f32 %v56, %v1019
    %1021 = vmatmul.f32.gmra.mxu0 %v1020
    %v1022 = vpop.f32.mrf.mxu0
    %v1023 = vadd.f32 %v999, %v1022
    %1024 = vdwg.mxu0
    %1025 = vmatpush.msra.mxu0 0.0
    %1026 = vmatpush.msra.mxu0 0.0
    %1027 = vmatpush.msra.mxu0 0.0
    %1028 = vmatpush.msra.mxu0 0.0
    %1029 = vmatpush.msra.mxu0 0.0
    %1030 = vmatpush.msra.mxu0 0.0
    %1031 = vmatpush.msra.mxu0 0.0
    %1032 = vmatpush.msra.mxu0 0.0
    %1033 = vmatpush.msra.mxu0 0.0
    %1034 = vmatpush.msra.mxu0 0.0
    %1035 = vmatpush.msra.mxu0 0.0
    %1036 = vmatpush.msra.mxu0 0.0
    %1037 = vmatpush.msra.mxu0 0.0
    %1038 = vmatpush.msra.mxu0 0.0
    %1039 = vmatpush.msra.mxu0 0.0
    %v1040 = vand.u32 %v947, 4294901760
    %1041 = vmatpush.msra.mxu0 %v1040
    %v1042 = vand.u32 %v56, 4294901760
    %v1043 = vsub.f32 %v56, %v1042
    %v1044 = vand.u32 %v1043, 4294901760
    %1045 = vmatmul.f32.gmra.mxu0 %v1044
    %v1046 = vpop.f32.mrf.mxu0
    %v1047 = vadd.f32 %v1023, %v1046
    %1048 = vdwg.mxu0
    %1049 = vmatpush.msra.mxu0 0.0
    %1050 = vmatpush.msra.mxu0 0.0
    %1051 = vmatpush.msra.mxu0 0.0
    %1052 = vmatpush.msra.mxu0 0.0
    %1053 = vmatpush.msra.mxu0 0.0
    %1054 = vmatpush.msra.mxu0 0.0
    %1055 = vmatpush.msra.mxu0 0.0
    %1056 = vmatpush.msra.mxu0 0.0
    %1057 = vmatpush.msra.mxu0 0.0
    %1058 = vmatpush.msra.mxu0 0.0
    %1059 = vmatpush.msra.mxu0 0.0
    %1060 = vmatpush.msra.mxu0 0.0
    %1061 = vmatpush.msra.mxu0 0.0
    %1062 = vmatpush.msra.mxu0 0.0
    %1063 = vmatpush.msra.mxu0 0.0
    %v1064 = vand.u32 %v947, 4294901760
    %v1065 = vsub.f32 %v947, %v1064
    %v1066 = vand.u32 %v1065, 4294901760
    %1067 = vmatpush.msra.mxu0 %v1066
    %v1068 = vand.u32 %v56, 4294901760
    %1069 = vmatmul.f32.gmra.mxu0 %v1068
    %v1070 = vpop.f32.mrf.mxu0
    %v1071 = vadd.f32 %v1047, %v1070
    %1072 = vdwg.mxu0
    %1073 = vmatpush.msra.mxu0 0.0
    %1074 = vmatpush.msra.mxu0 0.0
    %1075 = vmatpush.msra.mxu0 0.0
    %1076 = vmatpush.msra.mxu0 0.0
    %1077 = vmatpush.msra.mxu0 0.0
    %1078 = vmatpush.msra.mxu0 0.0
    %1079 = vmatpush.msra.mxu0 0.0
    %1080 = vmatpush.msra.mxu0 0.0
    %1081 = vmatpush.msra.mxu0 0.0
    %1082 = vmatpush.msra.mxu0 0.0
    %1083 = vmatpush.msra.mxu0 0.0
    %1084 = vmatpush.msra.mxu0 0.0
    %1085 = vmatpush.msra.mxu0 0.0
    %1086 = vmatpush.msra.mxu0 0.0
    %1087 = vmatpush.msra.mxu0 0.0
    %v1088 = vand.u32 %v947, 4294901760
    %1089 = vmatpush.msra.mxu0 %v1088
    %v1090 = vand.u32 %v56, 4294901760
    %1091 = vmatmul.f32.gmra.mxu0 %v1090
    %v1092 = vpop.f32.mrf.mxu0
    %v1093 = vadd.f32 %v1071, %v1092
    %1094 = vdwg.mxu0
    %1095 = vmatpush.msra.mxu0 0.0
    %1096 = vmatpush.msra.mxu0 0.0
    %1097 = vmatpush.msra.mxu0 0.0
    %1098 = vmatpush.msra.mxu0 0.0
    %1099 = vmatpush.msra.mxu0 0.0
    %1100 = vmatpush.msra.mxu0 0.0
    %1101 = vmatpush.msra.mxu0 0.0
    %1102 = vmatpush.msra.mxu0 0.0
    %1103 = vmatpush.msra.mxu0 0.0
    %1104 = vmatpush.msra.mxu0 0.0
    %1105 = vmatpush.msra.mxu0 0.0
    %1106 = vmatpush.msra.mxu0 0.0
    %1107 = vmatpush.msra.mxu0 0.0
    %1108 = vmatpush.msra.mxu0 0.0
    %1109 = vmatpush.msra.mxu0 0.0
    %v1110 = vand.u32 %v948, 4294901760
    %1111 = vmatpush.msra.mxu0 %v1110
    %v1112 = vand.u32 %v56, 4294901760
    %v1113 = vsub.f32 %v56, %v1112
    %v1114 = vand.u32 %v1113, 4294901760
    %v1115 = vsub.f32 %v1113, %v1114
    %v1116 = vand.u32 %v1115, 4294901760
    %1117 = vmatmul.f32.gmra.mxu0 %v1116
    %v1118 = vpop.f32.mrf.mxu0
    %v1119 = vadd.f32 0.0, %v1118
    %1120 = vdwg.mxu0
    %1121 = vmatpush.msra.mxu0 0.0
    %1122 = vmatpush.msra.mxu0 0.0
    %1123 = vmatpush.msra.mxu0 0.0
    %1124 = vmatpush.msra.mxu0 0.0
    %1125 = vmatpush.msra.mxu0 0.0
    %1126 = vmatpush.msra.mxu0 0.0
    %1127 = vmatpush.msra.mxu0 0.0
    %1128 = vmatpush.msra.mxu0 0.0
    %1129 = vmatpush.msra.mxu0 0.0
    %1130 = vmatpush.msra.mxu0 0.0
    %1131 = vmatpush.msra.mxu0 0.0
    %1132 = vmatpush.msra.mxu0 0.0
    %1133 = vmatpush.msra.mxu0 0.0
    %1134 = vmatpush.msra.mxu0 0.0
    %1135 = vmatpush.msra.mxu0 0.0
    %v1136 = vand.u32 %v948, 4294901760
    %v1137 = vsub.f32 %v948, %v1136
    %v1138 = vand.u32 %v1137, 4294901760
    %v1139 = vsub.f32 %v1137, %v1138
    %v1140 = vand.u32 %v1139, 4294901760
    %1141 = vmatpush.msra.mxu0 %v1140
    %v1142 = vand.u32 %v56, 4294901760
    %1143 = vmatmul.f32.gmra.mxu0 %v1142
    %v1144 = vpop.f32.mrf.mxu0
    %v1145 = vadd.f32 %v1119, %v1144
    %1146 = vdwg.mxu0
    %1147 = vmatpush.msra.mxu0 0.0
    %1148 = vmatpush.msra.mxu0 0.0
    %1149 = vmatpush.msra.mxu0 0.0
    %1150 = vmatpush.msra.mxu0 0.0
    %1151 = vmatpush.msra.mxu0 0.0
    %1152 = vmatpush.msra.mxu0 0.0
    %1153 = vmatpush.msra.mxu0 0.0
    %1154 = vmatpush.msra.mxu0 0.0
    %1155 = vmatpush.msra.mxu0 0.0
    %1156 = vmatpush.msra.mxu0 0.0
    %1157 = vmatpush.msra.mxu0 0.0
    %1158 = vmatpush.msra.mxu0 0.0
    %1159 = vmatpush.msra.mxu0 0.0
    %1160 = vmatpush.msra.mxu0 0.0
    %1161 = vmatpush.msra.mxu0 0.0
    %v1162 = vand.u32 %v948, 4294901760
    %v1163 = vsub.f32 %v948, %v1162
    %1164 = vmatpush.msra.mxu0 %v1163
    %v1165 = vand.u32 %v56, 4294901760
    %v1166 = vsub.f32 %v56, %v1165
    %1167 = vmatmul.f32.gmra.mxu0 %v1166
    %v1168 = vpop.f32.mrf.mxu0
    %v1169 = vadd.f32 %v1145, %v1168
    %1170 = vdwg.mxu0
    %1171 = vmatpush.msra.mxu0 0.0
    %1172 = vmatpush.msra.mxu0 0.0
    %1173 = vmatpush.msra.mxu0 0.0
    %1174 = vmatpush.msra.mxu0 0.0
    %1175 = vmatpush.msra.mxu0 0.0
    %1176 = vmatpush.msra.mxu0 0.0
    %1177 = vmatpush.msra.mxu0 0.0
    %1178 = vmatpush.msra.mxu0 0.0
    %1179 = vmatpush.msra.mxu0 0.0
    %1180 = vmatpush.msra.mxu0 0.0
    %1181 = vmatpush.msra.mxu0 0.0
    %1182 = vmatpush.msra.mxu0 0.0
    %1183 = vmatpush.msra.mxu0 0.0
    %1184 = vmatpush.msra.mxu0 0.0
    %1185 = vmatpush.msra.mxu0 0.0
    %v1186 = vand.u32 %v948, 4294901760
    %1187 = vmatpush.msra.mxu0 %v1186
    %v1188 = vand.u32 %v56, 4294901760
    %v1189 = vsub.f32 %v56, %v1188
    %v1190 = vand.u32 %v1189, 4294901760
    %1191 = vmatmul.f32.gmra.mxu0 %v1190
    %v1192 = vpop.f32.mrf.mxu0
    %v1193 = vadd.f32 %v1169, %v1192
    %1194 = vdwg.mxu0
    %1195 = vmatpush.msra.mxu0 0.0
    %1196 = vmatpush.msra.mxu0 0.0
    %1197 = vmatpush.msra.mxu0 0.0
    %1198 = vmatpush.msra.mxu0 0.0
    %1199 = vmatpush.msra.mxu0 0.0
    %1200 = vmatpush.msra.mxu0 0.0
    %1201 = vmatpush.msra.mxu0 0.0
    %1202 = vmatpush.msra.mxu0 0.0
    %1203 = vmatpush.msra.mxu0 0.0
    %1204 = vmatpush.msra.mxu0 0.0
    %1205 = vmatpush.msra.mxu0 0.0
    %1206 = vmatpush.msra.mxu0 0.0
    %1207 = vmatpush.msra.mxu0 0.0
    %1208 = vmatpush.msra.mxu0 0.0
    %1209 = vmatpush.msra.mxu0 0.0
    %v1210 = vand.u32 %v948, 4294901760
    %v1211 = vsub.f32 %v948, %v1210
    %v1212 = vand.u32 %v1211, 4294901760
    %1213 = vmatpush.msra.mxu0 %v1212
    %v1214 = vand.u32 %v56, 4294901760
    %1215 = vmatmul.f32.gmra.mxu0 %v1214
    %v1216 = vpop.f32.mrf.mxu0
    %v1217 = vadd.f32 %v1193, %v1216
    %1218 = vdwg.mxu0
    %1219 = vmatpush.msra.mxu0 0.0
    %1220 = vmatpush.msra.mxu0 0.0
    %1221 = vmatpush.msra.mxu0 0.0
    %1222 = vmatpush.msra.mxu0 0.0
    %1223 = vmatpush.msra.mxu0 0.0
    %1224 = vmatpush.msra.mxu0 0.0
    %1225 = vmatpush.msra.mxu0 0.0
    %1226 = vmatpush.msra.mxu0 0.0
    %1227 = vmatpush.msra.mxu0 0.0
    %1228 = vmatpush.msra.mxu0 0.0
    %1229 = vmatpush.msra.mxu0 0.0
    %1230 = vmatpush.msra.mxu0 0.0
    %1231 = vmatpush.msra.mxu0 0.0
    %1232 = vmatpush.msra.mxu0 0.0
    %1233 = vmatpush.msra.mxu0 0.0
    %v1234 = vand.u32 %v948, 4294901760
    %1235 = vmatpush.msra.mxu0 %v1234
    %v1236 = vand.u32 %v56, 4294901760
    %1237 = vmatmul.f32.gmra.mxu0 %v1236
    %v1238 = vpop.f32.mrf.mxu0
    %v1239 = vadd.f32 %v1217, %v1238
    %1240 = vdwg.mxu0
    %v1241 = vmul.f32 %v947, %v356
    %v1242 = vmul.f32 %v948, %v358
    %1243 = vmatpush.msra.mxu0 0.0
    %1244 = vmatpush.msra.mxu0 0.0
    %1245 = vmatpush.msra.mxu0 0.0
    %1246 = vmatpush.msra.mxu0 0.0
    %1247 = vmatpush.msra.mxu0 0.0
    %1248 = vmatpush.msra.mxu0 0.0
    %1249 = vmatpush.msra.mxu0 0.0
    %1250 = vmatpush.msra.mxu0 0.0
    %1251 = vmatpush.msra.mxu0 0.0
    %1252 = vmatpush.msra.mxu0 0.0
    %1253 = vmatpush.msra.mxu0 0.0
    %1254 = vmatpush.msra.mxu0 0.0
    %1255 = vmatpush.msra.mxu0 0.0
    %1256 = vmatpush.msra.mxu0 0.0
    %1257 = vmatpush.msra.mxu0 0.0
    %v1258 = vand.u32 %v1241, 4294901760
    %1259 = vmatpush.msra.mxu0 %v1258
    %v1260 = vand.u32 %v56, 4294901760
    %v1261 = vsub.f32 %v56, %v1260
    %v1262 = vand.u32 %v1261, 4294901760
    %v1263 = vsub.f32 %v1261, %v1262
    %v1264 = vand.u32 %v1263, 4294901760
    %1265 = vmatmul.f32.gmra.mxu0 %v1264
    %v1266 = vpop.f32.mrf.mxu0
    %v1267 = vadd.f32 0.0, %v1266
    %1268 = vdwg.mxu0
    %1269 = vmatpush.msra.mxu0 0.0
    %1270 = vmatpush.msra.mxu0 0.0
    %1271 = vmatpush.msra.mxu0 0.0
    %1272 = vmatpush.msra.mxu0 0.0
    %1273 = vmatpush.msra.mxu0 0.0
    %1274 = vmatpush.msra.mxu0 0.0
    %1275 = vmatpush.msra.mxu0 0.0
    %1276 = vmatpush.msra.mxu0 0.0
    %1277 = vmatpush.msra.mxu0 0.0
    %1278 = vmatpush.msra.mxu0 0.0
    %1279 = vmatpush.msra.mxu0 0.0
    %1280 = vmatpush.msra.mxu0 0.0
    %1281 = vmatpush.msra.mxu0 0.0
    %1282 = vmatpush.msra.mxu0 0.0
    %1283 = vmatpush.msra.mxu0 0.0
    %v1284 = vand.u32 %v1241, 4294901760
    %v1285 = vsub.f32 %v1241, %v1284
    %v1286 = vand.u32 %v1285, 4294901760
    %v1287 = vsub.f32 %v1285, %v1286
    %v1288 = vand.u32 %v1287, 4294901760
    %1289 = vmatpush.msra.mxu0 %v1288
    %v1290 = vand.u32 %v56, 4294901760
    %1291 = vmatmul.f32.gmra.mxu0 %v1290
    %v1292 = vpop.f32.mrf.mxu0
    %v1293 = vadd.f32 %v1267, %v1292
    %1294 = vdwg.mxu0
    %1295 = vmatpush.msra.mxu0 0.0
    %1296 = vmatpush.msra.mxu0 0.0
    %1297 = vmatpush.msra.mxu0 0.0
    %1298 = vmatpush.msra.mxu0 0.0
    %1299 = vmatpush.msra.mxu0 0.0
    %1300 = vmatpush.msra.mxu0 0.0
    %1301 = vmatpush.msra.mxu0 0.0
    %1302 = vmatpush.msra.mxu0 0.0
    %1303 = vmatpush.msra.mxu0 0.0
    %1304 = vmatpush.msra.mxu0 0.0
    %1305 = vmatpush.msra.mxu0 0.0
    %1306 = vmatpush.msra.mxu0 0.0
    %1307 = vmatpush.msra.mxu0 0.0
    %1308 = vmatpush.msra.mxu0 0.0
    %1309 = vmatpush.msra.mxu0 0.0
    %v1310 = vand.u32 %v1241, 4294901760
    %v1311 = vsub.f32 %v1241, %v1310
    %1312 = vmatpush.msra.mxu0 %v1311
    %v1313 = vand.u32 %v56, 4294901760
    %v1314 = vsub.f32 %v56, %v1313
    %1315 = vmatmul.f32.gmra.mxu0 %v1314
    %v1316 = vpop.f32.mrf.mxu0
    %v1317 = vadd.f32 %v1293, %v1316
    %1318 = vdwg.mxu0
    %1319 = vmatpush.msra.mxu0 0.0
    %1320 = vmatpush.msra.mxu0 0.0
    %1321 = vmatpush.msra.mxu0 0.0
    %1322 = vmatpush.msra.mxu0 0.0
    %1323 = vmatpush.msra.mxu0 0.0
    %1324 = vmatpush.msra.mxu0 0.0
    %1325 = vmatpush.msra.mxu0 0.0
    %1326 = vmatpush.msra.mxu0 0.0
    %1327 = vmatpush.msra.mxu0 0.0
    %1328 = vmatpush.msra.mxu0 0.0
    %1329 = vmatpush.msra.mxu0 0.0
    %1330 = vmatpush.msra.mxu0 0.0
    %1331 = vmatpush.msra.mxu0 0.0
    %1332 = vmatpush.msra.mxu0 0.0
    %1333 = vmatpush.msra.mxu0 0.0
    %v1334 = vand.u32 %v1241, 4294901760
    %1335 = vmatpush.msra.mxu0 %v1334
    %v1336 = vand.u32 %v56, 4294901760
    %v1337 = vsub.f32 %v56, %v1336
    %v1338 = vand.u32 %v1337, 4294901760
    %1339 = vmatmul.f32.gmra.mxu0 %v1338
    %v1340 = vpop.f32.mrf.mxu0
    %v1341 = vadd.f32 %v1317, %v1340
    %1342 = vdwg.mxu0
    %1343 = vmatpush.msra.mxu0 0.0
    %1344 = vmatpush.msra.mxu0 0.0
    %1345 = vmatpush.msra.mxu0 0.0
    %1346 = vmatpush.msra.mxu0 0.0
    %1347 = vmatpush.msra.mxu0 0.0
    %1348 = vmatpush.msra.mxu0 0.0
    %1349 = vmatpush.msra.mxu0 0.0
    %1350 = vmatpush.msra.mxu0 0.0
    %1351 = vmatpush.msra.mxu0 0.0
    %1352 = vmatpush.msra.mxu0 0.0
    %1353 = vmatpush.msra.mxu0 0.0
    %1354 = vmatpush.msra.mxu0 0.0
    %1355 = vmatpush.msra.mxu0 0.0
    %1356 = vmatpush.msra.mxu0 0.0
    %1357 = vmatpush.msra.mxu0 0.0
    %v1358 = vand.u32 %v1241, 4294901760
    %v1359 = vsub.f32 %v1241, %v1358
    %v1360 = vand.u32 %v1359, 4294901760
    %1361 = vmatpush.msra.mxu0 %v1360
    %v1362 = vand.u32 %v56, 4294901760
    %1363 = vmatmul.f32.gmra.mxu0 %v1362
    %v1364 = vpop.f32.mrf.mxu0
    %v1365 = vadd.f32 %v1341, %v1364
    %1366 = vdwg.mxu0
    %1367 = vmatpush.msra.mxu0 0.0
    %1368 = vmatpush.msra.mxu0 0.0
    %1369 = vmatpush.msra.mxu0 0.0
    %1370 = vmatpush.msra.mxu0 0.0
    %1371 = vmatpush.msra.mxu0 0.0
    %1372 = vmatpush.msra.mxu0 0.0
    %1373 = vmatpush.msra.mxu0 0.0
    %1374 = vmatpush.msra.mxu0 0.0
    %1375 = vmatpush.msra.mxu0 0.0
    %1376 = vmatpush.msra.mxu0 0.0
    %1377 = vmatpush.msra.mxu0 0.0
    %1378 = vmatpush.msra.mxu0 0.0
    %1379 = vmatpush.msra.mxu0 0.0
    %1380 = vmatpush.msra.mxu0 0.0
    %1381 = vmatpush.msra.mxu0 0.0
    %v1382 = vand.u32 %v1241, 4294901760
    %1383 = vmatpush.msra.mxu0 %v1382
    %v1384 = vand.u32 %v56, 4294901760
    %1385 = vmatmul.f32.gmra.mxu0 %v1384
    %v1386 = vpop.f32.mrf.mxu0
    %v1387 = vadd.f32 %v1365, %v1386
    %1388 = vdwg.mxu0
    %1389 = vmatpush.msra.mxu0 0.0
    %1390 = vmatpush.msra.mxu0 0.0
    %1391 = vmatpush.msra.mxu0 0.0
    %1392 = vmatpush.msra.mxu0 0.0
    %1393 = vmatpush.msra.mxu0 0.0
    %1394 = vmatpush.msra.mxu0 0.0
    %1395 = vmatpush.msra.mxu0 0.0
    %1396 = vmatpush.msra.mxu0 0.0
    %1397 = vmatpush.msra.mxu0 0.0
    %1398 = vmatpush.msra.mxu0 0.0
    %1399 = vmatpush.msra.mxu0 0.0
    %1400 = vmatpush.msra.mxu0 0.0
    %1401 = vmatpush.msra.mxu0 0.0
    %1402 = vmatpush.msra.mxu0 0.0
    %1403 = vmatpush.msra.mxu0 0.0
    %v1404 = vand.u32 %v1242, 4294901760
    %1405 = vmatpush.msra.mxu0 %v1404
    %v1406 = vand.u32 %v56, 4294901760
    %v1407 = vsub.f32 %v56, %v1406
    %v1408 = vand.u32 %v1407, 4294901760
    %v1409 = vsub.f32 %v1407, %v1408
    %v1410 = vand.u32 %v1409, 4294901760
    %1411 = vmatmul.f32.gmra.mxu0 %v1410
    %v1412 = vpop.f32.mrf.mxu0
    %v1413 = vadd.f32 0.0, %v1412
    %1414 = vdwg.mxu0
    %1415 = vmatpush.msra.mxu0 0.0
    %1416 = vmatpush.msra.mxu0 0.0
    %1417 = vmatpush.msra.mxu0 0.0
    %1418 = vmatpush.msra.mxu0 0.0
    %1419 = vmatpush.msra.mxu0 0.0
    %1420 = vmatpush.msra.mxu0 0.0
    %1421 = vmatpush.msra.mxu0 0.0
    %1422 = vmatpush.msra.mxu0 0.0
    %1423 = vmatpush.msra.mxu0 0.0
    %1424 = vmatpush.msra.mxu0 0.0
    %1425 = vmatpush.msra.mxu0 0.0
    %1426 = vmatpush.msra.mxu0 0.0
    %1427 = vmatpush.msra.mxu0 0.0
    %1428 = vmatpush.msra.mxu0 0.0
    %1429 = vmatpush.msra.mxu0 0.0
    %v1430 = vand.u32 %v1242, 4294901760
    %v1431 = vsub.f32 %v1242, %v1430
    %v1432 = vand.u32 %v1431, 4294901760
    %v1433 = vsub.f32 %v1431, %v1432
    %v1434 = vand.u32 %v1433, 4294901760
    %1435 = vmatpush.msra.mxu0 %v1434
    %v1436 = vand.u32 %v56, 4294901760
    %1437 = vmatmul.f32.gmra.mxu0 %v1436
    %v1438 = vpop.f32.mrf.mxu0
    %v1439 = vadd.f32 %v1413, %v1438
    %1440 = vdwg.mxu0
    %1441 = vmatpush.msra.mxu0 0.0
    %1442 = vmatpush.msra.mxu0 0.0
    %1443 = vmatpush.msra.mxu0 0.0
    %1444 = vmatpush.msra.mxu0 0.0
    %1445 = vmatpush.msra.mxu0 0.0
    %1446 = vmatpush.msra.mxu0 0.0
    %1447 = vmatpush.msra.mxu0 0.0
    %1448 = vmatpush.msra.mxu0 0.0
    %1449 = vmatpush.msra.mxu0 0.0
    %1450 = vmatpush.msra.mxu0 0.0
    %1451 = vmatpush.msra.mxu0 0.0
    %1452 = vmatpush.msra.mxu0 0.0
    %1453 = vmatpush.msra.mxu0 0.0
    %1454 = vmatpush.msra.mxu0 0.0
    %1455 = vmatpush.msra.mxu0 0.0
    %v1456 = vand.u32 %v1242, 4294901760
    %v1457 = vsub.f32 %v1242, %v1456
    %1458 = vmatpush.msra.mxu0 %v1457
    %v1459 = vand.u32 %v56, 4294901760
    %v1460 = vsub.f32 %v56, %v1459
    %1461 = vmatmul.f32.gmra.mxu0 %v1460
    %v1462 = vpop.f32.mrf.mxu0
    %v1463 = vadd.f32 %v1439, %v1462
    %1464 = vdwg.mxu0
    %1465 = vmatpush.msra.mxu0 0.0
    %1466 = vmatpush.msra.mxu0 0.0
    %1467 = vmatpush.msra.mxu0 0.0
    %1468 = vmatpush.msra.mxu0 0.0
    %1469 = vmatpush.msra.mxu0 0.0
    %1470 = vmatpush.msra.mxu0 0.0
    %1471 = vmatpush.msra.mxu0 0.0
    %1472 = vmatpush.msra.mxu0 0.0
    %1473 = vmatpush.msra.mxu0 0.0
    %1474 = vmatpush.msra.mxu0 0.0
    %1475 = vmatpush.msra.mxu0 0.0
    %1476 = vmatpush.msra.mxu0 0.0
    %1477 = vmatpush.msra.mxu0 0.0
    %1478 = vmatpush.msra.mxu0 0.0
    %1479 = vmatpush.msra.mxu0 0.0
    %v1480 = vand.u32 %v1242, 4294901760
    %1481 = vmatpush.msra.mxu0 %v1480
    %v1482 = vand.u32 %v56, 4294901760
    %v1483 = vsub.f32 %v56, %v1482
    %v1484 = vand.u32 %v1483, 4294901760
    %1485 = vmatmul.f32.gmra.mxu0 %v1484
    %v1486 = vpop.f32.mrf.mxu0
    %v1487 = vadd.f32 %v1463, %v1486
    %1488 = vdwg.mxu0
    %1489 = vmatpush.msra.mxu0 0.0
    %1490 = vmatpush.msra.mxu0 0.0
    %1491 = vmatpush.msra.mxu0 0.0
    %1492 = vmatpush.msra.mxu0 0.0
    %1493 = vmatpush.msra.mxu0 0.0
    %1494 = vmatpush.msra.mxu0 0.0
    %1495 = vmatpush.msra.mxu0 0.0
    %1496 = vmatpush.msra.mxu0 0.0
    %1497 = vmatpush.msra.mxu0 0.0
    %1498 = vmatpush.msra.mxu0 0.0
    %1499 = vmatpush.msra.mxu0 0.0
    %1500 = vmatpush.msra.mxu0 0.0
    %1501 = vmatpush.msra.mxu0 0.0
    %1502 = vmatpush.msra.mxu0 0.0
    %1503 = vmatpush.msra.mxu0 0.0
    %v1504 = vand.u32 %v1242, 4294901760
    %v1505 = vsub.f32 %v1242, %v1504
    %v1506 = vand.u32 %v1505, 4294901760
    %1507 = vmatpush.msra.mxu0 %v1506
    %v1508 = vand.u32 %v56, 4294901760
    %1509 = vmatmul.f32.gmra.mxu0 %v1508
    %v1510 = vpop.f32.mrf.mxu0
    %v1511 = vadd.f32 %v1487, %v1510
    %1512 = vdwg.mxu0
    %1513 = vmatpush.msra.mxu0 0.0
    %1514 = vmatpush.msra.mxu0 0.0
    %1515 = vmatpush.msra.mxu0 0.0
    %1516 = vmatpush.msra.mxu0 0.0
    %1517 = vmatpush.msra.mxu0 0.0
    %1518 = vmatpush.msra.mxu0 0.0
    %1519 = vmatpush.msra.mxu0 0.0
    %1520 = vmatpush.msra.mxu0 0.0
    %1521 = vmatpush.msra.mxu0 0.0
    %1522 = vmatpush.msra.mxu0 0.0
    %1523 = vmatpush.msra.mxu0 0.0
    %1524 = vmatpush.msra.mxu0 0.0
    %1525 = vmatpush.msra.mxu0 0.0
    %1526 = vmatpush.msra.mxu0 0.0
    %1527 = vmatpush.msra.mxu0 0.0
    %v1528 = vand.u32 %v1242, 4294901760
    %1529 = vmatpush.msra.mxu0 %v1528
    %v1530 = vand.u32 %v56, 4294901760
    %1531 = vmatmul.f32.gmra.mxu0 %v1530
    %v1532 = vpop.f32.mrf.mxu0
    %v1533 = vadd.f32 %v1511, %v1532
    %1534 = vdwg.mxu0
    %v1535 = vadd.f32 %v505, 0.0
    %v1536 = vadd.f32 %v651, 0.0
    %v1537 = vadd.f32 %v799, 0.0
    %v1538 = vadd.f32 %v945, 0.0
    %v1539 = vadd.f32 %v1093, 0.0
    %v1540 = vadd.f32 %v1239, 0.0
    %v1541 = vadd.f32 %v1387, 0.0
    %v1542 = vadd.f32 %v1533, 0.0
    %v1543 = vsub.f32 %v353, %v354
    %v1544 = vld [vmem:[%s2] sm:$0x1]
    %v1545 = vmul.f32 %v1543, %v1543
    %v1546 = vadd.f32 %v1544, %v1545
    %vm1547 = vcmask 253952
    %1548 = vst.msk [vmem:[%s2] sm:$0x1] %vm1547, %v1546
    %v1549 = vsub.f32 %v1535, %v1536
    %v1550 = vmul.f32 %v1549, 0.125
    %v1551 = vld [vmem:[%s2 + $0x1] sm:$0x1]
    %v1552 = vmul.f32 %v1550, %v1550
    %v1553 = vadd.f32 %v1551, %v1552
    %1554 = vst.msk [vmem:[%s2 + $0x1] sm:$0x1] %vm1547, %v1553
    %v1555 = vsub.f32 %v1537, %v1538
    %v1556 = vmul.f32 %v1555, 0.125
    %v1557 = vld [vmem:[%s2 + $0x2] sm:$0x1]
    %v1558 = vmul.f32 %v1556, %v1556
    %v1559 = vadd.f32 %v1557, %v1558
    %1560 = vst.msk [vmem:[%s2 + $0x2] sm:$0x1] %vm1547, %v1559
    %v1561 = vsub.f32 %v1539, %v1540
    %v1562 = vmul.f32 %v1561, 0.125
    %v1563 = vld [vmem:[%s2 + $0x3] sm:$0x1]
    %v1564 = vmul.f32 %v1562, %v1562
    %v1565 = vadd.f32 %v1563, %v1564
    %1566 = vst.msk [vmem:[%s2 + $0x3] sm:$0x1] %vm1547, %v1565
    %v1567 = vsub.f32 %v1541, %v1542
    %v1568 = vmul.f32 %v1567, 0.125
    %v1569 = vld [vmem:[%s2 + $0x4] sm:$0x1]
    %v1570 = vmul.f32 %v1568, %v1568
    %v1571 = vadd.f32 %v1569, %v1570
    %1572 = vst.msk [vmem:[%s2 + $0x4] sm:$0x1] %vm1547, %v1571
    // Predicated region
    $region22: #{tpu_custom_call.1} parent=1 // pred_check
      _
    $region23: #{tpu_custom_call.1} parent=1 // pred_check_branch
      %1574 = sbr.rel (0) target = $region25
    $region24: #{tpu_custom_call.1} parent=1 // pred_region
      _
    $region25: #{tpu_custom_call.1} parent=1 // pred_fallthru
      _
    // Predicated region
    $region26: #{tpu_custom_call.1} parent=1 // pred_check
      _
    $region27: #{tpu_custom_call.1} parent=1 // pred_check_branch
      %1576 = sbr.rel (0) target = $region29
    $region28: #{tpu_custom_call.1} parent=1 // pred_region
      _
    $region29: #{tpu_custom_call.1} parent=1 // pred_fallthru
      _
    %1577 = vsyncpa [#allocation3], 1
    %1578 = vsyncpa [#allocation5], 1

</llo_original>
